<compile_context>
chip_gen: v5e
topology: v5e:2x2
jax: 0.10.0
libtpu: 0.0.40
codegen_flags: <defaults>
</compile_context>

<pallas_src>
import jax
import jax.numpy as jnp
from jax.experimental import pallas as pl
from jax.experimental.pallas import tpu as pltpu  # noqa: F401  (TPU backend)

# ---- scaled-down Duet hyper-parameters (same structural relationships) -----
B = 2
MAX_DOC_TERMS = 16            # original 200
MAX_QUERY_TERMS = 8           # original 20
NUM_HIDDEN_NODES = 32         # original 300
TERM_WINDOW_SIZE = 3
POOLING_KERNEL_WIDTH_DOC = 8  # original 100
POOLING_KERNEL_WIDTH_QUERY = MAX_QUERY_TERMS - TERM_WINDOW_SIZE + 1                           # 6
NUM_POOLING_WINDOWS_DOC = MAX_DOC_TERMS - TERM_WINDOW_SIZE + 1 - POOLING_KERNEL_WIDTH_DOC + 1  # 7
VOCAB_SIZE = 50

H = NUM_HIDDEN_NODES
Q = MAX_QUERY_TERMS
D = MAX_DOC_TERMS
V = VOCAB_SIZE
NPW = NUM_POOLING_WINDOWS_DOC
SCALE = 0.1


def _sliding_max(z, window):
    """Stride-1 max pool along axis 0 (valid windows) via a log-tree of maxima.

    z: (L, H)  ->  (L - window + 1, H).  ceil(log2(window)) steps instead of
    window-1 unrolled maxima (matters at the original pkw=100)."""
    t = z
    w = 1
    while 2 * w <= window:
        n = t.shape[0] - w
        t = jnp.maximum(t[:n], t[w:w + n])
        w *= 2
    if w < window:                      # non-power-of-two windows (e.g. 100)
        r = window - w                  # r <= w, so the two covers overlap
        n = t.shape[0] - r
        t = jnp.maximum(t[:n], t[r:r + n])
    return t


# ---------------------------------------------------------------------------
# The single fused kernel
# ---------------------------------------------------------------------------
def _duet_kernel(
    # inputs / ids / masks
    xl_ref,    # (Q*B, D)   x_local channels-last, rows q-major (row = q*B + b)
    idq_ref,   # (B*Q, 1)   int32 query token ids, rows b-major
    idd_ref,   # (B*D, 1)   int32 doc   token ids, rows b-major
    mq_ref,    # (B*Q, 1)   query mask
    md_ref,    # (B*D, 1)   doc   mask
    emb_ref,   # (V, H)     embedding table
    # duet_local
    wlc_ref,   # (D, H)     Conv1d(D, H, 1) weight, channels-last
    blc_ref,   # (1, H)
    wl1_ref,   # (Q, H, H)  Linear(H*Q, H) with torch-Flatten perm folded in
    bl1_ref,   # (1, H)
    wl2_ref,   # (H, H)
    bl2_ref,   # (1, H)
    # duet_dist_q
    wq3_ref,   # (3, H, H)  Conv1d(H, H, 3) taps (k, C_in, C_out)
    bq3_ref,   # (1, H)
    wql_ref,   # (H, H)
    bql_ref,   # (1, H)
    # duet_dist_d
    wd3_ref,   # (3, H, H)
    bd3_ref,   # (1, H)
    wd1_ref,   # (H, H)     Conv1d(H, H, 1)
    bd1_ref,   # (1, H)
    # duet_dist
    wx1_ref,   # (NPW, H, H) Linear(H*NPW, H) with torch-Flatten perm folded in
    bx1_ref,   # (1, H)
    wx2_ref,   # (H, H)
    bx2_ref,   # (1, H)
    # duet_comb
    wc1_ref, bc1_ref, wc2_ref, bc2_ref, wc3_ref, bc3_ref,
    # output
    o_ref,     # (B, 1)
):
    f32 = jnp.float32
    dot = lambda a, b: jnp.dot(a, b, preferred_element_type=f32)
    relu = lambda t: jnp.maximum(t, 0.0)

    # ---- in-kernel embedding lookup: one-hot @ table on the MXU -------------
    iota_q = jax.lax.broadcasted_iota(jnp.int32, (B * Q, V), 1)
    emb_q = dot((idq_ref[...] == iota_q).astype(f32), emb_ref[...]) * mq_ref[...]  # (B*Q, H)
    iota_d = jax.lax.broadcasted_iota(jnp.int32, (B * D, V), 1)
    emb_d = dot((idd_ref[...] == iota_d).astype(f32), emb_ref[...]) * md_ref[...]  # (B*D, H)

    # ---- local path: k=1 conv + Flatten/Linear/ReLU x2, batch-stacked -------
    z = relu(dot(xl_ref[...], wlc_ref[...]) + blc_ref[...])          # (Q*B, H)
    acc = jnp.zeros((B, H), f32)
    for q in range(Q):                        # Flatten+Linear; perm folded in wl1
        acc = acc + dot(z[q * B:(q + 1) * B, :], wl1_ref[q])
    h_local = relu(acc + bl1_ref[...])                               # (B, H)
    h_local = relu(dot(h_local, wl2_ref[...]) + bl2_ref[...])        # (B, H)

    # ---- dist conv taps as full-block (aligned) matmuls, batch-stacked ------
    yq = [dot(emb_q, wq3_ref[k]) for k in range(3)]                  # 3 x (B*Q, H)
    yd = [dot(emb_d, wd3_ref[k]) for k in range(3)]                  # 3 x (B*D, H)

    Lq = Q - (TERM_WINDOW_SIZE - 1)           # conv output length (query) = 6
    Ld = D - (TERM_WINDOW_SIZE - 1)           # conv output length (doc)   = 14

    for b in range(B):                        # tiny per-batch tail (unrolled, B=2)
        # -- duet_dist_q: conv -> ReLU -> full-window max-pool -> Linear -> ReLU
        oq = b * Q
        zq = relu(yq[0][oq:oq + Lq] + yq[1][oq + 1:oq + 1 + Lq]
                  + yq[2][oq + 2:oq + 2 + Lq] + bq3_ref[...])        # (Lq, H)
        hq = jnp.max(zq, axis=0, keepdims=True)                      # (1, H)
        h_dist_q = relu(dot(hq, wql_ref[...]) + bql_ref[...])        # (1, H)

        # -- duet_dist_d: conv -> ReLU -> MaxPool(pkw, stride=1) -> 1x1 conv -> ReLU
        od = b * D
        zd = relu(yd[0][od:od + Ld] + yd[1][od + 1:od + 1 + Ld]
                  + yd[2][od + 2:od + 2 + Ld] + bd3_ref[...])        # (Ld, H)
        pooled = _sliding_max(zd, POOLING_KERNEL_WIDTH_DOC)          # (NPW, H)
        hd = relu(dot(pooled, wd1_ref[...]) + bd1_ref[...])          # (NPW, H)
        prod = hd * h_dist_q                                         # (NPW, H)

        # -- duet_dist: Flatten+Linear (perm folded in wx1) -> ReLU -> Linear -> ReLU
        acc_d = jnp.zeros((1, H), f32)
        for p_ in range(NPW):
            acc_d = acc_d + dot(prod[p_:p_ + 1, :], wx1_ref[p_])
        h_dist = relu(acc_d + bx1_ref[...])                          # (1, H)
        h_dist = relu(dot(h_dist, wx2_ref[...]) + bx2_ref[...])      # (1, H)

        # -- duet_comb ---------------------------------------------------------
        y = h_local[b:b + 1, :] + h_dist
        y = relu(dot(y, wc1_ref[...]) + bc1_ref[...])
        y = relu(dot(y, wc2_ref[...]) + bc2_ref[...])
        y = relu(dot(y, wc3_ref[...]) + bc3_ref[...])                # (1, 1)
        o_ref[b:b + 1, :] = y * SCALE


# ---------------------------------------------------------------------------
# One-time ("offline") param re-layout: fold torch Flatten permutations into
# the weight row orders so the kernel never has to transpose activations.
# ---------------------------------------------------------------------------
def prepare_params(p):
    kp = dict(p)
    kp["w_loc_conv"] = p["w_loc_conv"].T                                  # (D, H)
    kp["b_loc_conv"] = p["b_loc_conv"].T                                  # (1, H)
    # torch flattens (B, H, Q) as index h*Q+q  ->  group rows by position q.
    kp["w_loc1"] = p["w_loc1"].reshape(H, Q, H).transpose(1, 0, 2)        # (Q, H, H)
    # torch flattens (B, H, NPW) as index h*NPW+p  ->  group rows by window p.
    kp["w_dist1"] = p["w_dist1"].reshape(H, NPW, H).transpose(1, 0, 2)    # (NPW, H, H)
    return kp


# ---------------------------------------------------------------------------
# Forward pass: one fused pallas_call (everything resident in VMEM, no grid)
# ---------------------------------------------------------------------------
@jax.jit
def duet_forward(kp, x_local, x_dist_q, x_dist_d, x_mask_q, x_mask_d):
    # tiny layout prep: channels-last, batch folded into stacked rows
    xl = jnp.transpose(x_local, (2, 0, 1)).reshape(Q * B, D)   # row = q*B + b
    idq = x_dist_q.reshape(B * Q, 1).astype(jnp.int32)          # row = b*Q + q
    idd = x_dist_d.reshape(B * D, 1).astype(jnp.int32)          # row = b*D + t
    mq = x_mask_q.reshape(B * Q, 1).astype(jnp.float32)
    md = x_mask_d.reshape(B * D, 1).astype(jnp.float32)

    return pl.pallas_call(
        _duet_kernel,
        out_shape=jax.ShapeDtypeStruct((B, 1), jnp.float32),
        # Default whole-array VMEM blocks, single invocation: total working set
        # is ~150 KiB << VMEM, so no grid / pipelining / tiling is needed.
        cost_estimate=pl.CostEstimate(
            flops=600_000, transcendentals=0, bytes_accessed=130_000),
    )(xl, idq, idd, mq, md, kp["embed"],
      kp["w_loc_conv"], kp["b_loc_conv"], kp["w_loc1"], kp["b_loc1"],
      kp["w_loc2"], kp["b_loc2"],
      kp["wq3"], kp["bq3"], kp["wq_lin"], kp["bq_lin"],
      kp["wd3"], kp["bd3"], kp["wd1"], kp["bd1"],
      kp["w_dist1"], kp["b_dist1"], kp["w_dist2"], kp["b_dist2"],
      kp["w_c1"], kp["b_c1"], kp["w_c2"], kp["b_c2"], kp["w_c3"], kp["b_c3"])


# ---------------------------------------------------------------------------
# Plain-JAX reference (torch layouts / torch Flatten order) for validation
# ---------------------------------------------------------------------------
def duet_reference(p, x_local, x_dist_q, x_dist_d, x_mask_q, x_mask_d):
    relu = lambda t: jnp.maximum(t, 0.0)

    def conv3(x_blh, w_khd, b_1h):                    # x channels-last (B, L, H)
        L = x_blh.shape[1] - 2
        return (jnp.einsum('blh,hd->bld', x_blh[:, 0:L, :], w_khd[0])
                + jnp.einsum('blh,hd->bld', x_blh[:, 1:L + 1, :], w_khd[1])
                + jnp.einsum('blh,hd->bld', x_blh[:, 2:L + 2, :], w_khd[2])
                + b_1h[None, :, :])

    # local path
    conv = relu(jnp.einsum('hc,bcq->bhq', p["w_loc_conv"], x_local)
                + p["b_loc_conv"][None, :, :])                        # (B, H, Q)
    flat = conv.reshape(conv.shape[0], -1)                            # h*Q + q
    h_local = relu(flat @ p["w_loc1"] + p["b_loc1"])
    h_local = relu(h_local @ p["w_loc2"] + p["b_loc2"])
    # dist query
    emb_q = jnp.take(p["embed"], x_dist_q, axis=0) * x_mask_q         # (B, Q, H)
    zq = relu(conv3(emb_q, p["wq3"], p["bq3"]))
    h_dist_q = relu(jnp.max(zq, axis=1) @ p["wq_lin"] + p["bq_lin"])  # (B, H)
    # dist doc
    emb_d = jnp.take(p["embed"], x_dist_d, axis=0) * x_mask_d         # (B, D, H)
    zd = relu(conv3(emb_d, p["wd3"], p["bd3"]))                       # (B, D-2, H)
    pooled = jnp.stack([jnp.max(zd[:, i:i + POOLING_KERNEL_WIDTH_DOC, :], axis=1)
                        for i in range(NPW)], axis=1)                 # (B, NPW, H)
    hd = relu(jnp.einsum('bph,hd->bpd', pooled, p["wd1"]) + p["bd1"][None, :, :])
    prod = hd * h_dist_q[:, None, :]                                  # (B, NPW, H)
    flat_d = jnp.transpose(prod, (0, 2, 1)).reshape(prod.shape[0], -1)  # h*NPW + p
    h_dist = relu(flat_d @ p["w_dist1"] + p["b_dist1"])
    h_dist = relu(h_dist @ p["w_dist2"] + p["b_dist2"])
    # comb
    y = h_local + h_dist
    y = relu(y @ p["w_c1"] + p["b_c1"])
    y = relu(y @ p["w_c2"] + p["b_c2"])
    y = relu(y @ p["w_c3"] + p["b_c3"])
    return y * SCALE


# ---------------------------------------------------------------------------
if __name__ == "__main__":
    key = jax.random.PRNGKey(0)
    ks = iter(jax.random.split(key, 40))

    def nrm(shape, scale=0.1):
        return scale * jax.random.normal(next(ks), shape, dtype=jnp.float32)

    params = {
        # embedding table
        "embed": nrm((V, H)),
        # duet_local: Conv1d(MAX_DOC_TERMS, H, 1), Linear(H*Q, H), Linear(H, H)
        "w_loc_conv": nrm((H, D)), "b_loc_conv": nrm((H, 1)),
        "w_loc1": nrm((H * Q, H)), "b_loc1": nrm((1, H)),
        "w_loc2": nrm((H, H)), "b_loc2": nrm((1, H)),
        # duet_dist_q: Conv1d(H, H, 3) stored as (k, C_in, C_out), Linear(H, H)
        "wq3": nrm((3, H, H)), "bq3": nrm((1, H)),
        "wq_lin": nrm((H, H)), "bq_lin": nrm((1, H)),
        # duet_dist_d: Conv1d(H, H, 3), Conv1d(H, H, 1)
        "wd3": nrm((3, H, H)), "bd3": nrm((1, H)),
        "wd1": nrm((H, H)), "bd1": nrm((1, H)),
        # duet_dist: Linear(H*NPW, H), Linear(H, H)
        "w_dist1": nrm((H * NPW, H)), "b_dist1": nrm((1, H)),
        "w_dist2": nrm((H, H)), "b_dist2": nrm((1, H)),
        # duet_comb: Linear(H, H), Linear(H, H), Linear(H, 1)
        "w_c1": nrm((H, H)), "b_c1": nrm((1, H)),
        "w_c2": nrm((H, H)), "b_c2": nrm((1, H)),
        "w_c3": nrm((H, 1)), "b_c3": nrm((1, 1)),
    }

    # inputs
    x_local = jax.random.normal(next(ks), (B, D, Q), dtype=jnp.float32)
    x_dist_q = jax.random.randint(next(ks), (B, Q), 0, V, dtype=jnp.int32)
    x_dist_d = jax.random.randint(next(ks), (B, D), 0, V, dtype=jnp.int32)
    q_lens = jnp.array([Q, Q - 2])
    d_lens = jnp.array([D, D - 3])
    x_mask_q = (jnp.arange(Q)[None, :] < q_lens[:, None]).astype(jnp.float32)[..., None]
    x_mask_d = (jnp.arange(D)[None, :] < d_lens[:, None]).astype(jnp.float32)[..., None]

    kparams = prepare_params(params)   # one-time weight re-layout ("offline")

    y_score = duet_forward(kparams, x_local, x_dist_q, x_dist_d, x_mask_q, x_mask_d)
    y_score = jax.block_until_ready(y_score)

    # validate against plain-JAX reference (tolerance covers MXU bf16-pass f32 matmuls)
    y_ref = duet_reference(params, x_local, x_dist_q, x_dist_d, x_mask_q, x_mask_d)
    assert y_score.shape == (B, 1) and bool(jnp.all(jnp.isfinite(y_score)))
    assert bool(jnp.allclose(y_score, y_ref, rtol=5e-2, atol=5e-3)), (y_score, y_ref)
    print("KERNEL_OK")
</pallas_src>

<mosaic_0001>
module attributes {stable_mosaic.version = 11 : i64} {
  func.func @_duet_kernel(%arg0: memref<16x16xf32, #tpu.memory_space<vmem>>, %arg1: memref<16x1xi32, #tpu.memory_space<vmem>>, %arg2: memref<32x1xi32, #tpu.memory_space<vmem>>, %arg3: memref<16x1xf32, #tpu.memory_space<vmem>>, %arg4: memref<32x1xf32, #tpu.memory_space<vmem>>, %arg5: memref<50x32xf32, #tpu.memory_space<vmem>>, %arg6: memref<16x32xf32, #tpu.memory_space<vmem>>, %arg7: memref<1x32xf32, #tpu.memory_space<vmem>>, %arg8: memref<8x32x32xf32, #tpu.memory_space<vmem>>, %arg9: memref<1x32xf32, #tpu.memory_space<vmem>>, %arg10: memref<32x32xf32, #tpu.memory_space<vmem>>, %arg11: memref<1x32xf32, #tpu.memory_space<vmem>>, %arg12: memref<3x32x32xf32, #tpu.memory_space<vmem>>, %arg13: memref<1x32xf32, #tpu.memory_space<vmem>>, %arg14: memref<32x32xf32, #tpu.memory_space<vmem>>, %arg15: memref<1x32xf32, #tpu.memory_space<vmem>>, %arg16: memref<3x32x32xf32, #tpu.memory_space<vmem>>, %arg17: memref<1x32xf32, #tpu.memory_space<vmem>>, %arg18: memref<32x32xf32, #tpu.memory_space<vmem>>, %arg19: memref<1x32xf32, #tpu.memory_space<vmem>>, %arg20: memref<7x32x32xf32, #tpu.memory_space<vmem>>, %arg21: memref<1x32xf32, #tpu.memory_space<vmem>>, %arg22: memref<32x32xf32, #tpu.memory_space<vmem>>, %arg23: memref<1x32xf32, #tpu.memory_space<vmem>>, %arg24: memref<32x32xf32, #tpu.memory_space<vmem>>, %arg25: memref<1x32xf32, #tpu.memory_space<vmem>>, %arg26: memref<32x32xf32, #tpu.memory_space<vmem>>, %arg27: memref<1x32xf32, #tpu.memory_space<vmem>>, %arg28: memref<32x1xf32, #tpu.memory_space<vmem>>, %arg29: memref<1x1xf32, #tpu.memory_space<vmem>>, %arg30: memref<2x1xf32, #tpu.memory_space<vmem>>) attributes {dimension_semantics = [], scalar_prefetch = 0 : i64, scratch_operands = 0 : i64, tpu.core_type = #tpu.core_type<tc>} {
    %0 = tpu.iota {dimensions = array<i32: 1>} : vector<16x50xi32>
    %c0 = arith.constant 0 : index
    %c0_0 = arith.constant 0 : index
    %1 = vector.load %arg1[%c0, %c0_0] : memref<16x1xi32, #tpu.memory_space<vmem>>, vector<16x1xi32>
    %2 = vector.broadcast %1 : vector<16x1xi32> to vector<16x50xi32>
    %3 = arith.cmpi eq, %2, %0 : vector<16x50xi32>
    %4 = arith.extui %3 : vector<16x50xi1> to vector<16x50xi32>
    %5 = arith.sitofp %4 : vector<16x50xi32> to vector<16x50xf32>
    %c0_1 = arith.constant 0 : index
    %c0_2 = arith.constant 0 : index
    %6 = vector.load %arg5[%c0_1, %c0_2] : memref<50x32xf32, #tpu.memory_space<vmem>>, vector<50x32xf32>
    %cst = arith.constant dense<0.000000e+00> : vector<16x32xf32>
    %7 = tpu.matmul %5, %6, %cst {dimension_numbers = #tpu.dot_dimension_numbers<[1], [0], [0], [1], [0, 0, 1, 1], [], []>} : vector<16x50xf32>, vector<50x32xf32>, vector<16x32xf32> -> vector<16x32xf32>
    %c0_3 = arith.constant 0 : index
    %c0_4 = arith.constant 0 : index
    %8 = vector.load %arg3[%c0_3, %c0_4] : memref<16x1xf32, #tpu.memory_space<vmem>>, vector<16x1xf32>
    %9 = vector.broadcast %8 : vector<16x1xf32> to vector<16x32xf32>
    %10 = arith.mulf %7, %9 : vector<16x32xf32>
    %11 = tpu.iota {dimensions = array<i32: 1>} : vector<32x50xi32>
    %c0_5 = arith.constant 0 : index
    %c0_6 = arith.constant 0 : index
    %12 = vector.load %arg2[%c0_5, %c0_6] : memref<32x1xi32, #tpu.memory_space<vmem>>, vector<32x1xi32>
    %13 = vector.broadcast %12 : vector<32x1xi32> to vector<32x50xi32>
    %14 = arith.cmpi eq, %13, %11 : vector<32x50xi32>
    %15 = arith.extui %14 : vector<32x50xi1> to vector<32x50xi32>
    %16 = arith.sitofp %15 : vector<32x50xi32> to vector<32x50xf32>
    %c0_7 = arith.constant 0 : index
    %c0_8 = arith.constant 0 : index
    %17 = vector.load %arg5[%c0_7, %c0_8] : memref<50x32xf32, #tpu.memory_space<vmem>>, vector<50x32xf32>
    %cst_9 = arith.constant dense<0.000000e+00> : vector<32x32xf32>
    %18 = tpu.matmul %16, %17, %cst_9 {dimension_numbers = #tpu.dot_dimension_numbers<[1], [0], [0], [1], [0, 0, 1, 1], [], []>} : vector<32x50xf32>, vector<50x32xf32>, vector<32x32xf32> -> vector<32x32xf32>
    %c0_10 = arith.constant 0 : index
    %c0_11 = arith.constant 0 : index
    %19 = vector.load %arg4[%c0_10, %c0_11] : memref<32x1xf32, #tpu.memory_space<vmem>>, vector<32x1xf32>
    %20 = vector.broadcast %19 : vector<32x1xf32> to vector<32x32xf32>
    %21 = arith.mulf %18, %20 : vector<32x32xf32>
    %c0_12 = arith.constant 0 : index
    %c0_13 = arith.constant 0 : index
    %22 = vector.load %arg0[%c0_12, %c0_13] : memref<16x16xf32, #tpu.memory_space<vmem>>, vector<16x16xf32>
    %c0_14 = arith.constant 0 : index
    %c0_15 = arith.constant 0 : index
    %23 = vector.load %arg6[%c0_14, %c0_15] : memref<16x32xf32, #tpu.memory_space<vmem>>, vector<16x32xf32>
    %cst_16 = arith.constant dense<0.000000e+00> : vector<16x32xf32>
    %24 = tpu.matmul %22, %23, %cst_16 {dimension_numbers = #tpu.dot_dimension_numbers<[1], [0], [0], [1], [0, 0, 1, 1], [], []>} : vector<16x16xf32>, vector<16x32xf32>, vector<16x32xf32> -> vector<16x32xf32>
    %c0_17 = arith.constant 0 : index
    %c0_18 = arith.constant 0 : index
    %25 = vector.load %arg7[%c0_17, %c0_18] : memref<1x32xf32, #tpu.memory_space<vmem>>, vector<1x32xf32>
    %26 = vector.broadcast %25 : vector<1x32xf32> to vector<16x32xf32>
    %27 = arith.addf %24, %26 : vector<16x32xf32>
    %cst_19 = arith.constant 0.000000e+00 : f32
    %28 = vector.broadcast %cst_19 : f32 to vector<16x32xf32>
    %29 = arith.maximumf %27, %28 : vector<16x32xf32>
    %cst_20 = arith.constant 0.000000e+00 : f32
    %30 = vector.broadcast %cst_20 : f32 to vector<2x32xf32>
    %31 = vector.extract_strided_slice %29 {offsets = [0, 0], sizes = [2, 32], strides = [1, 1]} : vector<16x32xf32> to vector<2x32xf32>
    %c0_21 = arith.constant 0 : index
    %c0_22 = arith.constant 0 : index
    %c0_23 = arith.constant 0 : index
    %32 = vector.load %arg8[%c0_21, %c0_22, %c0_23] : memref<8x32x32xf32, #tpu.memory_space<vmem>>, vector<1x32x32xf32>
    %33 = vector.shape_cast %32 : vector<1x32x32xf32> to vector<32x32xf32>
    %cst_24 = arith.constant dense<0.000000e+00> : vector<2x32xf32>
    %34 = tpu.matmul %31, %33, %cst_24 {dimension_numbers = #tpu.dot_dimension_numbers<[1], [0], [0], [1], [0, 0, 1, 1], [], []>} : vector<2x32xf32>, vector<32x32xf32>, vector<2x32xf32> -> vector<2x32xf32>
    %35 = arith.addf %30, %34 : vector<2x32xf32>
    %36 = vector.extract_strided_slice %29 {offsets = [2, 0], sizes = [2, 32], strides = [1, 1]} : vector<16x32xf32> to vector<2x32xf32>
    %c1 = arith.constant 1 : index
    %c0_25 = arith.constant 0 : index
    %c0_26 = arith.constant 0 : index
    %37 = vector.load %arg8[%c1, %c0_25, %c0_26] : memref<8x32x32xf32, #tpu.memory_space<vmem>>, vector<1x32x32xf32>
    %38 = vector.shape_cast %37 : vector<1x32x32xf32> to vector<32x32xf32>
    %cst_27 = arith.constant dense<0.000000e+00> : vector<2x32xf32>
    %39 = tpu.matmul %36, %38, %cst_27 {dimension_numbers = #tpu.dot_dimension_numbers<[1], [0], [0], [1], [0, 0, 1, 1], [], []>} : vector<2x32xf32>, vector<32x32xf32>, vector<2x32xf32> -> vector<2x32xf32>
    %40 = arith.addf %35, %39 : vector<2x32xf32>
    %41 = vector.extract_strided_slice %29 {offsets = [4, 0], sizes = [2, 32], strides = [1, 1]} : vector<16x32xf32> to vector<2x32xf32>
    %c2 = arith.constant 2 : index
    %c0_28 = arith.constant 0 : index
    %c0_29 = arith.constant 0 : index
    %42 = vector.load %arg8[%c2, %c0_28, %c0_29] : memref<8x32x32xf32, #tpu.memory_space<vmem>>, vector<1x32x32xf32>
    %43 = vector.shape_cast %42 : vector<1x32x32xf32> to vector<32x32xf32>
    %cst_30 = arith.constant dense<0.000000e+00> : vector<2x32xf32>
    %44 = tpu.matmul %41, %43, %cst_30 {dimension_numbers = #tpu.dot_dimension_numbers<[1], [0], [0], [1], [0, 0, 1, 1], [], []>} : vector<2x32xf32>, vector<32x32xf32>, vector<2x32xf32> -> vector<2x32xf32>
    %45 = arith.addf %40, %44 : vector<2x32xf32>
    %46 = vector.extract_strided_slice %29 {offsets = [6, 0], sizes = [2, 32], strides = [1, 1]} : vector<16x32xf32> to vector<2x32xf32>
    %c3 = arith.constant 3 : index
    %c0_31 = arith.constant 0 : index
    %c0_32 = arith.constant 0 : index
    %47 = vector.load %arg8[%c3, %c0_31, %c0_32] : memref<8x32x32xf32, #tpu.memory_space<vmem>>, vector<1x32x32xf32>
    %48 = vector.shape_cast %47 : vector<1x32x32xf32> to vector<32x32xf32>
    %cst_33 = arith.constant dense<0.000000e+00> : vector<2x32xf32>
    %49 = tpu.matmul %46, %48, %cst_33 {dimension_numbers = #tpu.dot_dimension_numbers<[1], [0], [0], [1], [0, 0, 1, 1], [], []>} : vector<2x32xf32>, vector<32x32xf32>, vector<2x32xf32> -> vector<2x32xf32>
    %50 = arith.addf %45, %49 : vector<2x32xf32>
    %51 = vector.extract_strided_slice %29 {offsets = [8, 0], sizes = [2, 32], strides = [1, 1]} : vector<16x32xf32> to vector<2x32xf32>
    %c4 = arith.constant 4 : index
    %c0_34 = arith.constant 0 : index
    %c0_35 = arith.constant 0 : index
    %52 = vector.load %arg8[%c4, %c0_34, %c0_35] : memref<8x32x32xf32, #tpu.memory_space<vmem>>, vector<1x32x32xf32>
    %53 = vector.shape_cast %52 : vector<1x32x32xf32> to vector<32x32xf32>
    %cst_36 = arith.constant dense<0.000000e+00> : vector<2x32xf32>
    %54 = tpu.matmul %51, %53, %cst_36 {dimension_numbers = #tpu.dot_dimension_numbers<[1], [0], [0], [1], [0, 0, 1, 1], [], []>} : vector<2x32xf32>, vector<32x32xf32>, vector<2x32xf32> -> vector<2x32xf32>
    %55 = arith.addf %50, %54 : vector<2x32xf32>
    %56 = vector.extract_strided_slice %29 {offsets = [10, 0], sizes = [2, 32], strides = [1, 1]} : vector<16x32xf32> to vector<2x32xf32>
    %c5 = arith.constant 5 : index
    %c0_37 = arith.constant 0 : index
    %c0_38 = arith.constant 0 : index
    %57 = vector.load %arg8[%c5, %c0_37, %c0_38] : memref<8x32x32xf32, #tpu.memory_space<vmem>>, vector<1x32x32xf32>
    %58 = vector.shape_cast %57 : vector<1x32x32xf32> to vector<32x32xf32>
    %cst_39 = arith.constant dense<0.000000e+00> : vector<2x32xf32>
    %59 = tpu.matmul %56, %58, %cst_39 {dimension_numbers = #tpu.dot_dimension_numbers<[1], [0], [0], [1], [0, 0, 1, 1], [], []>} : vector<2x32xf32>, vector<32x32xf32>, vector<2x32xf32> -> vector<2x32xf32>
    %60 = arith.addf %55, %59 : vector<2x32xf32>
    %61 = vector.extract_strided_slice %29 {offsets = [12, 0], sizes = [2, 32], strides = [1, 1]} : vector<16x32xf32> to vector<2x32xf32>
    %c6 = arith.constant 6 : index
    %c0_40 = arith.constant 0 : index
    %c0_41 = arith.constant 0 : index
    %62 = vector.load %arg8[%c6, %c0_40, %c0_41] : memref<8x32x32xf32, #tpu.memory_space<vmem>>, vector<1x32x32xf32>
    %63 = vector.shape_cast %62 : vector<1x32x32xf32> to vector<32x32xf32>
    %cst_42 = arith.constant dense<0.000000e+00> : vector<2x32xf32>
    %64 = tpu.matmul %61, %63, %cst_42 {dimension_numbers = #tpu.dot_dimension_numbers<[1], [0], [0], [1], [0, 0, 1, 1], [], []>} : vector<2x32xf32>, vector<32x32xf32>, vector<2x32xf32> -> vector<2x32xf32>
    %65 = arith.addf %60, %64 : vector<2x32xf32>
    %66 = vector.extract_strided_slice %29 {offsets = [14, 0], sizes = [2, 32], strides = [1, 1]} : vector<16x32xf32> to vector<2x32xf32>
    %c7 = arith.constant 7 : index
    %c0_43 = arith.constant 0 : index
    %c0_44 = arith.constant 0 : index
    %67 = vector.load %arg8[%c7, %c0_43, %c0_44] : memref<8x32x32xf32, #tpu.memory_space<vmem>>, vector<1x32x32xf32>
    %68 = vector.shape_cast %67 : vector<1x32x32xf32> to vector<32x32xf32>
    %cst_45 = arith.constant dense<0.000000e+00> : vector<2x32xf32>
    %69 = tpu.matmul %66, %68, %cst_45 {dimension_numbers = #tpu.dot_dimension_numbers<[1], [0], [0], [1], [0, 0, 1, 1], [], []>} : vector<2x32xf32>, vector<32x32xf32>, vector<2x32xf32> -> vector<2x32xf32>
    %70 = arith.addf %65, %69 : vector<2x32xf32>
    %c0_46 = arith.constant 0 : index
    %c0_47 = arith.constant 0 : index
    %71 = vector.load %arg9[%c0_46, %c0_47] : memref<1x32xf32, #tpu.memory_space<vmem>>, vector<1x32xf32>
    %72 = vector.broadcast %71 : vector<1x32xf32> to vector<2x32xf32>
    %73 = arith.addf %70, %72 : vector<2x32xf32>
    %cst_48 = arith.constant 0.000000e+00 : f32
    %74 = vector.broadcast %cst_48 : f32 to vector<2x32xf32>
    %75 = arith.maximumf %73, %74 : vector<2x32xf32>
    %c0_49 = arith.constant 0 : index
    %c0_50 = arith.constant 0 : index
    %76 = vector.load %arg10[%c0_49, %c0_50] : memref<32x32xf32, #tpu.memory_space<vmem>>, vector<32x32xf32>
    %cst_51 = arith.constant dense<0.000000e+00> : vector<2x32xf32>
    %77 = tpu.matmul %75, %76, %cst_51 {dimension_numbers = #tpu.dot_dimension_numbers<[1], [0], [0], [1], [0, 0, 1, 1], [], []>} : vector<2x32xf32>, vector<32x32xf32>, vector<2x32xf32> -> vector<2x32xf32>
    %c0_52 = arith.constant 0 : index
    %c0_53 = arith.constant 0 : index
    %78 = vector.load %arg11[%c0_52, %c0_53] : memref<1x32xf32, #tpu.memory_space<vmem>>, vector<1x32xf32>
    %79 = vector.broadcast %78 : vector<1x32xf32> to vector<2x32xf32>
    %80 = arith.addf %77, %79 : vector<2x32xf32>
    %cst_54 = arith.constant 0.000000e+00 : f32
    %81 = vector.broadcast %cst_54 : f32 to vector<2x32xf32>
    %82 = arith.maximumf %80, %81 : vector<2x32xf32>
    %c0_55 = arith.constant 0 : index
    %c0_56 = arith.constant 0 : index
    %c0_57 = arith.constant 0 : index
    %83 = vector.load %arg12[%c0_55, %c0_56, %c0_57] : memref<3x32x32xf32, #tpu.memory_space<vmem>>, vector<1x32x32xf32>
    %84 = vector.shape_cast %83 : vector<1x32x32xf32> to vector<32x32xf32>
    %cst_58 = arith.constant dense<0.000000e+00> : vector<16x32xf32>
    %85 = tpu.matmul %10, %84, %cst_58 {dimension_numbers = #tpu.dot_dimension_numbers<[1], [0], [0], [1], [0, 0, 1, 1], [], []>} : vector<16x32xf32>, vector<32x32xf32>, vector<16x32xf32> -> vector<16x32xf32>
    %c1_59 = arith.constant 1 : index
    %c0_60 = arith.constant 0 : index
    %c0_61 = arith.constant 0 : index
    %86 = vector.load %arg12[%c1_59, %c0_60, %c0_61] : memref<3x32x32xf32, #tpu.memory_space<vmem>>, vector<1x32x32xf32>
    %87 = vector.shape_cast %86 : vector<1x32x32xf32> to vector<32x32xf32>
    %cst_62 = arith.constant dense<0.000000e+00> : vector<16x32xf32>
    %88 = tpu.matmul %10, %87, %cst_62 {dimension_numbers = #tpu.dot_dimension_numbers<[1], [0], [0], [1], [0, 0, 1, 1], [], []>} : vector<16x32xf32>, vector<32x32xf32>, vector<16x32xf32> -> vector<16x32xf32>
    %c2_63 = arith.constant 2 : index
    %c0_64 = arith.constant 0 : index
    %c0_65 = arith.constant 0 : index
    %89 = vector.load %arg12[%c2_63, %c0_64, %c0_65] : memref<3x32x32xf32, #tpu.memory_space<vmem>>, vector<1x32x32xf32>
    %90 = vector.shape_cast %89 : vector<1x32x32xf32> to vector<32x32xf32>
    %cst_66 = arith.constant dense<0.000000e+00> : vector<16x32xf32>
    %91 = tpu.matmul %10, %90, %cst_66 {dimension_numbers = #tpu.dot_dimension_numbers<[1], [0], [0], [1], [0, 0, 1, 1], [], []>} : vector<16x32xf32>, vector<32x32xf32>, vector<16x32xf32> -> vector<16x32xf32>
    %c0_67 = arith.constant 0 : index
    %c0_68 = arith.constant 0 : index
    %c0_69 = arith.constant 0 : index
    %92 = vector.load %arg16[%c0_67, %c0_68, %c0_69] : memref<3x32x32xf32, #tpu.memory_space<vmem>>, vector<1x32x32xf32>
    %93 = vector.shape_cast %92 : vector<1x32x32xf32> to vector<32x32xf32>
    %cst_70 = arith.constant dense<0.000000e+00> : vector<32x32xf32>
    %94 = tpu.matmul %21, %93, %cst_70 {dimension_numbers = #tpu.dot_dimension_numbers<[1], [0], [0], [1], [0, 0, 1, 1], [], []>} : vector<32x32xf32>, vector<32x32xf32>, vector<32x32xf32> -> vector<32x32xf32>
    %c1_71 = arith.constant 1 : index
    %c0_72 = arith.constant 0 : index
    %c0_73 = arith.constant 0 : index
    %95 = vector.load %arg16[%c1_71, %c0_72, %c0_73] : memref<3x32x32xf32, #tpu.memory_space<vmem>>, vector<1x32x32xf32>
    %96 = vector.shape_cast %95 : vector<1x32x32xf32> to vector<32x32xf32>
    %cst_74 = arith.constant dense<0.000000e+00> : vector<32x32xf32>
    %97 = tpu.matmul %21, %96, %cst_74 {dimension_numbers = #tpu.dot_dimension_numbers<[1], [0], [0], [1], [0, 0, 1, 1], [], []>} : vector<32x32xf32>, vector<32x32xf32>, vector<32x32xf32> -> vector<32x32xf32>
    %c2_75 = arith.constant 2 : index
    %c0_76 = arith.constant 0 : index
    %c0_77 = arith.constant 0 : index
    %98 = vector.load %arg16[%c2_75, %c0_76, %c0_77] : memref<3x32x32xf32, #tpu.memory_space<vmem>>, vector<1x32x32xf32>
    %99 = vector.shape_cast %98 : vector<1x32x32xf32> to vector<32x32xf32>
    %cst_78 = arith.constant dense<0.000000e+00> : vector<32x32xf32>
    %100 = tpu.matmul %21, %99, %cst_78 {dimension_numbers = #tpu.dot_dimension_numbers<[1], [0], [0], [1], [0, 0, 1, 1], [], []>} : vector<32x32xf32>, vector<32x32xf32>, vector<32x32xf32> -> vector<32x32xf32>
    %101 = vector.extract_strided_slice %85 {offsets = [0, 0], sizes = [6, 32], strides = [1, 1]} : vector<16x32xf32> to vector<6x32xf32>
    %102 = vector.extract_strided_slice %88 {offsets = [1, 0], sizes = [6, 32], strides = [1, 1]} : vector<16x32xf32> to vector<6x32xf32>
    %103 = arith.addf %101, %102 : vector<6x32xf32>
    %104 = vector.extract_strided_slice %91 {offsets = [2, 0], sizes = [6, 32], strides = [1, 1]} : vector<16x32xf32> to vector<6x32xf32>
    %105 = arith.addf %103, %104 : vector<6x32xf32>
    %c0_79 = arith.constant 0 : index
    %c0_80 = arith.constant 0 : index
    %106 = vector.load %arg13[%c0_79, %c0_80] : memref<1x32xf32, #tpu.memory_space<vmem>>, vector<1x32xf32>
    %107 = vector.broadcast %106 : vector<1x32xf32> to vector<6x32xf32>
    %108 = arith.addf %105, %107 : vector<6x32xf32>
    %cst_81 = arith.constant 0.000000e+00 : f32
    %109 = vector.broadcast %cst_81 : f32 to vector<6x32xf32>
    %110 = arith.maximumf %108, %109 : vector<6x32xf32>
    %cst_82 = arith.constant dense<0xFF800000> : vector<32xf32>
    %111 = vector.multi_reduction <maximumf>, %110, %cst_82 [0] : vector<6x32xf32> to vector<32xf32>
    %112 = vector.shape_cast %111 : vector<32xf32> to vector<1x32xf32>
    %c0_83 = arith.constant 0 : index
    %c0_84 = arith.constant 0 : index
    %113 = vector.load %arg14[%c0_83, %c0_84] : memref<32x32xf32, #tpu.memory_space<vmem>>, vector<32x32xf32>
    %cst_85 = arith.constant dense<0.000000e+00> : vector<1x32xf32>
    %114 = tpu.matmul %112, %113, %cst_85 {dimension_numbers = #tpu.dot_dimension_numbers<[1], [0], [0], [1], [0, 0, 1, 1], [], []>} : vector<1x32xf32>, vector<32x32xf32>, vector<1x32xf32> -> vector<1x32xf32>
    %c0_86 = arith.constant 0 : index
    %c0_87 = arith.constant 0 : index
    %115 = vector.load %arg15[%c0_86, %c0_87] : memref<1x32xf32, #tpu.memory_space<vmem>>, vector<1x32xf32>
    %116 = arith.addf %114, %115 : vector<1x32xf32>
    %cst_88 = arith.constant 0.000000e+00 : f32
    %117 = vector.broadcast %cst_88 : f32 to vector<1x32xf32>
    %118 = arith.maximumf %116, %117 : vector<1x32xf32>
    %119 = vector.extract_strided_slice %94 {offsets = [0, 0], sizes = [14, 32], strides = [1, 1]} : vector<32x32xf32> to vector<14x32xf32>
    %120 = vector.extract_strided_slice %97 {offsets = [1, 0], sizes = [14, 32], strides = [1, 1]} : vector<32x32xf32> to vector<14x32xf32>
    %121 = arith.addf %119, %120 : vector<14x32xf32>
    %122 = vector.extract_strided_slice %100 {offsets = [2, 0], sizes = [14, 32], strides = [1, 1]} : vector<32x32xf32> to vector<14x32xf32>
    %123 = arith.addf %121, %122 : vector<14x32xf32>
    %c0_89 = arith.constant 0 : index
    %c0_90 = arith.constant 0 : index
    %124 = vector.load %arg17[%c0_89, %c0_90] : memref<1x32xf32, #tpu.memory_space<vmem>>, vector<1x32xf32>
    %125 = vector.broadcast %124 : vector<1x32xf32> to vector<14x32xf32>
    %126 = arith.addf %123, %125 : vector<14x32xf32>
    %cst_91 = arith.constant 0.000000e+00 : f32
    %127 = vector.broadcast %cst_91 : f32 to vector<14x32xf32>
    %128 = arith.maximumf %126, %127 : vector<14x32xf32>
    %129 = vector.extract_strided_slice %128 {offsets = [0, 0], sizes = [13, 32], strides = [1, 1]} : vector<14x32xf32> to vector<13x32xf32>
    %130 = vector.extract_strided_slice %128 {offsets = [1, 0], sizes = [13, 32], strides = [1, 1]} : vector<14x32xf32> to vector<13x32xf32>
    %131 = arith.maximumf %129, %130 : vector<13x32xf32>
    %132 = vector.extract_strided_slice %131 {offsets = [0, 0], sizes = [11, 32], strides = [1, 1]} : vector<13x32xf32> to vector<11x32xf32>
    %133 = vector.extract_strided_slice %131 {offsets = [2, 0], sizes = [11, 32], strides = [1, 1]} : vector<13x32xf32> to vector<11x32xf32>
    %134 = arith.maximumf %132, %133 : vector<11x32xf32>
    %135 = vector.extract_strided_slice %134 {offsets = [0, 0], sizes = [7, 32], strides = [1, 1]} : vector<11x32xf32> to vector<7x32xf32>
    %136 = vector.extract_strided_slice %134 {offsets = [4, 0], sizes = [7, 32], strides = [1, 1]} : vector<11x32xf32> to vector<7x32xf32>
    %137 = arith.maximumf %135, %136 : vector<7x32xf32>
    %c0_92 = arith.constant 0 : index
    %c0_93 = arith.constant 0 : index
    %138 = vector.load %arg18[%c0_92, %c0_93] : memref<32x32xf32, #tpu.memory_space<vmem>>, vector<32x32xf32>
    %cst_94 = arith.constant dense<0.000000e+00> : vector<7x32xf32>
    %139 = tpu.matmul %137, %138, %cst_94 {dimension_numbers = #tpu.dot_dimension_numbers<[1], [0], [0], [1], [0, 0, 1, 1], [], []>} : vector<7x32xf32>, vector<32x32xf32>, vector<7x32xf32> -> vector<7x32xf32>
    %c0_95 = arith.constant 0 : index
    %c0_96 = arith.constant 0 : index
    %140 = vector.load %arg19[%c0_95, %c0_96] : memref<1x32xf32, #tpu.memory_space<vmem>>, vector<1x32xf32>
    %141 = vector.broadcast %140 : vector<1x32xf32> to vector<7x32xf32>
    %142 = arith.addf %139, %141 : vector<7x32xf32>
    %cst_97 = arith.constant 0.000000e+00 : f32
    %143 = vector.broadcast %cst_97 : f32 to vector<7x32xf32>
    %144 = arith.maximumf %142, %143 : vector<7x32xf32>
    %145 = vector.broadcast %118 : vector<1x32xf32> to vector<7x32xf32>
    %146 = arith.mulf %144, %145 : vector<7x32xf32>
    %cst_98 = arith.constant 0.000000e+00 : f32
    %147 = vector.broadcast %cst_98 : f32 to vector<1x32xf32>
    %148 = vector.extract_strided_slice %146 {offsets = [0, 0], sizes = [1, 32], strides = [1, 1]} : vector<7x32xf32> to vector<1x32xf32>
    %c0_99 = arith.constant 0 : index
    %c0_100 = arith.constant 0 : index
    %c0_101 = arith.constant 0 : index
    %149 = vector.load %arg20[%c0_99, %c0_100, %c0_101] : memref<7x32x32xf32, #tpu.memory_space<vmem>>, vector<1x32x32xf32>
    %150 = vector.shape_cast %149 : vector<1x32x32xf32> to vector<32x32xf32>
    %cst_102 = arith.constant dense<0.000000e+00> : vector<1x32xf32>
    %151 = tpu.matmul %148, %150, %cst_102 {dimension_numbers = #tpu.dot_dimension_numbers<[1], [0], [0], [1], [0, 0, 1, 1], [], []>} : vector<1x32xf32>, vector<32x32xf32>, vector<1x32xf32> -> vector<1x32xf32>
    %152 = arith.addf %147, %151 : vector<1x32xf32>
    %153 = vector.extract_strided_slice %146 {offsets = [1, 0], sizes = [1, 32], strides = [1, 1]} : vector<7x32xf32> to vector<1x32xf32>
    %c1_103 = arith.constant 1 : index
    %c0_104 = arith.constant 0 : index
    %c0_105 = arith.constant 0 : index
    %154 = vector.load %arg20[%c1_103, %c0_104, %c0_105] : memref<7x32x32xf32, #tpu.memory_space<vmem>>, vector<1x32x32xf32>
    %155 = vector.shape_cast %154 : vector<1x32x32xf32> to vector<32x32xf32>
    %cst_106 = arith.constant dense<0.000000e+00> : vector<1x32xf32>
    %156 = tpu.matmul %153, %155, %cst_106 {dimension_numbers = #tpu.dot_dimension_numbers<[1], [0], [0], [1], [0, 0, 1, 1], [], []>} : vector<1x32xf32>, vector<32x32xf32>, vector<1x32xf32> -> vector<1x32xf32>
    %157 = arith.addf %152, %156 : vector<1x32xf32>
    %158 = vector.extract_strided_slice %146 {offsets = [2, 0], sizes = [1, 32], strides = [1, 1]} : vector<7x32xf32> to vector<1x32xf32>
    %c2_107 = arith.constant 2 : index
    %c0_108 = arith.constant 0 : index
    %c0_109 = arith.constant 0 : index
    %159 = vector.load %arg20[%c2_107, %c0_108, %c0_109] : memref<7x32x32xf32, #tpu.memory_space<vmem>>, vector<1x32x32xf32>
    %160 = vector.shape_cast %159 : vector<1x32x32xf32> to vector<32x32xf32>
    %cst_110 = arith.constant dense<0.000000e+00> : vector<1x32xf32>
    %161 = tpu.matmul %158, %160, %cst_110 {dimension_numbers = #tpu.dot_dimension_numbers<[1], [0], [0], [1], [0, 0, 1, 1], [], []>} : vector<1x32xf32>, vector<32x32xf32>, vector<1x32xf32> -> vector<1x32xf32>
    %162 = arith.addf %157, %161 : vector<1x32xf32>
    %163 = vector.extract_strided_slice %146 {offsets = [3, 0], sizes = [1, 32], strides = [1, 1]} : vector<7x32xf32> to vector<1x32xf32>
    %c3_111 = arith.constant 3 : index
    %c0_112 = arith.constant 0 : index
    %c0_113 = arith.constant 0 : index
    %164 = vector.load %arg20[%c3_111, %c0_112, %c0_113] : memref<7x32x32xf32, #tpu.memory_space<vmem>>, vector<1x32x32xf32>
    %165 = vector.shape_cast %164 : vector<1x32x32xf32> to vector<32x32xf32>
    %cst_114 = arith.constant dense<0.000000e+00> : vector<1x32xf32>
    %166 = tpu.matmul %163, %165, %cst_114 {dimension_numbers = #tpu.dot_dimension_numbers<[1], [0], [0], [1], [0, 0, 1, 1], [], []>} : vector<1x32xf32>, vector<32x32xf32>, vector<1x32xf32> -> vector<1x32xf32>
    %167 = arith.addf %162, %166 : vector<1x32xf32>
    %168 = vector.extract_strided_slice %146 {offsets = [4, 0], sizes = [1, 32], strides = [1, 1]} : vector<7x32xf32> to vector<1x32xf32>
    %c4_115 = arith.constant 4 : index
    %c0_116 = arith.constant 0 : index
    %c0_117 = arith.constant 0 : index
    %169 = vector.load %arg20[%c4_115, %c0_116, %c0_117] : memref<7x32x32xf32, #tpu.memory_space<vmem>>, vector<1x32x32xf32>
    %170 = vector.shape_cast %169 : vector<1x32x32xf32> to vector<32x32xf32>
    %cst_118 = arith.constant dense<0.000000e+00> : vector<1x32xf32>
    %171 = tpu.matmul %168, %170, %cst_118 {dimension_numbers = #tpu.dot_dimension_numbers<[1], [0], [0], [1], [0, 0, 1, 1], [], []>} : vector<1x32xf32>, vector<32x32xf32>, vector<1x32xf32> -> vector<1x32xf32>
    %172 = arith.addf %167, %171 : vector<1x32xf32>
    %173 = vector.extract_strided_slice %146 {offsets = [5, 0], sizes = [1, 32], strides = [1, 1]} : vector<7x32xf32> to vector<1x32xf32>
    %c5_119 = arith.constant 5 : index
    %c0_120 = arith.constant 0 : index
    %c0_121 = arith.constant 0 : index
    %174 = vector.load %arg20[%c5_119, %c0_120, %c0_121] : memref<7x32x32xf32, #tpu.memory_space<vmem>>, vector<1x32x32xf32>
    %175 = vector.shape_cast %174 : vector<1x32x32xf32> to vector<32x32xf32>
    %cst_122 = arith.constant dense<0.000000e+00> : vector<1x32xf32>
    %176 = tpu.matmul %173, %175, %cst_122 {dimension_numbers = #tpu.dot_dimension_numbers<[1], [0], [0], [1], [0, 0, 1, 1], [], []>} : vector<1x32xf32>, vector<32x32xf32>, vector<1x32xf32> -> vector<1x32xf32>
    %177 = arith.addf %172, %176 : vector<1x32xf32>
    %178 = vector.extract_strided_slice %146 {offsets = [6, 0], sizes = [1, 32], strides = [1, 1]} : vector<7x32xf32> to vector<1x32xf32>
    %c6_123 = arith.constant 6 : index
    %c0_124 = arith.constant 0 : index
    %c0_125 = arith.constant 0 : index
    %179 = vector.load %arg20[%c6_123, %c0_124, %c0_125] : memref<7x32x32xf32, #tpu.memory_space<vmem>>, vector<1x32x32xf32>
    %180 = vector.shape_cast %179 : vector<1x32x32xf32> to vector<32x32xf32>
    %cst_126 = arith.constant dense<0.000000e+00> : vector<1x32xf32>
    %181 = tpu.matmul %178, %180, %cst_126 {dimension_numbers = #tpu.dot_dimension_numbers<[1], [0], [0], [1], [0, 0, 1, 1], [], []>} : vector<1x32xf32>, vector<32x32xf32>, vector<1x32xf32> -> vector<1x32xf32>
    %182 = arith.addf %177, %181 : vector<1x32xf32>
    %c0_127 = arith.constant 0 : index
    %c0_128 = arith.constant 0 : index
    %183 = vector.load %arg21[%c0_127, %c0_128] : memref<1x32xf32, #tpu.memory_space<vmem>>, vector<1x32xf32>
    %184 = arith.addf %182, %183 : vector<1x32xf32>
    %cst_129 = arith.constant 0.000000e+00 : f32
    %185 = vector.broadcast %cst_129 : f32 to vector<1x32xf32>
    %186 = arith.maximumf %184, %185 : vector<1x32xf32>
    %c0_130 = arith.constant 0 : index
    %c0_131 = arith.constant 0 : index
    %187 = vector.load %arg22[%c0_130, %c0_131] : memref<32x32xf32, #tpu.memory_space<vmem>>, vector<32x32xf32>
    %cst_132 = arith.constant dense<0.000000e+00> : vector<1x32xf32>
    %188 = tpu.matmul %186, %187, %cst_132 {dimension_numbers = #tpu.dot_dimension_numbers<[1], [0], [0], [1], [0, 0, 1, 1], [], []>} : vector<1x32xf32>, vector<32x32xf32>, vector<1x32xf32> -> vector<1x32xf32>
    %c0_133 = arith.constant 0 : index
    %c0_134 = arith.constant 0 : index
    %189 = vector.load %arg23[%c0_133, %c0_134] : memref<1x32xf32, #tpu.memory_space<vmem>>, vector<1x32xf32>
    %190 = arith.addf %188, %189 : vector<1x32xf32>
    %cst_135 = arith.constant 0.000000e+00 : f32
    %191 = vector.broadcast %cst_135 : f32 to vector<1x32xf32>
    %192 = arith.maximumf %190, %191 : vector<1x32xf32>
    %193 = vector.extract_strided_slice %82 {offsets = [0, 0], sizes = [1, 32], strides = [1, 1]} : vector<2x32xf32> to vector<1x32xf32>
    %194 = arith.addf %193, %192 : vector<1x32xf32>
    %c0_136 = arith.constant 0 : index
    %c0_137 = arith.constant 0 : index
    %195 = vector.load %arg24[%c0_136, %c0_137] : memref<32x32xf32, #tpu.memory_space<vmem>>, vector<32x32xf32>
    %cst_138 = arith.constant dense<0.000000e+00> : vector<1x32xf32>
    %196 = tpu.matmul %194, %195, %cst_138 {dimension_numbers = #tpu.dot_dimension_numbers<[1], [0], [0], [1], [0, 0, 1, 1], [], []>} : vector<1x32xf32>, vector<32x32xf32>, vector<1x32xf32> -> vector<1x32xf32>
    %c0_139 = arith.constant 0 : index
    %c0_140 = arith.constant 0 : index
    %197 = vector.load %arg25[%c0_139, %c0_140] : memref<1x32xf32, #tpu.memory_space<vmem>>, vector<1x32xf32>
    %198 = arith.addf %196, %197 : vector<1x32xf32>
    %cst_141 = arith.constant 0.000000e+00 : f32
    %199 = vector.broadcast %cst_141 : f32 to vector<1x32xf32>
    %200 = arith.maximumf %198, %199 : vector<1x32xf32>
    %c0_142 = arith.constant 0 : index
    %c0_143 = arith.constant 0 : index
    %201 = vector.load %arg26[%c0_142, %c0_143] : memref<32x32xf32, #tpu.memory_space<vmem>>, vector<32x32xf32>
    %cst_144 = arith.constant dense<0.000000e+00> : vector<1x32xf32>
    %202 = tpu.matmul %200, %201, %cst_144 {dimension_numbers = #tpu.dot_dimension_numbers<[1], [0], [0], [1], [0, 0, 1, 1], [], []>} : vector<1x32xf32>, vector<32x32xf32>, vector<1x32xf32> -> vector<1x32xf32>
    %c0_145 = arith.constant 0 : index
    %c0_146 = arith.constant 0 : index
    %203 = vector.load %arg27[%c0_145, %c0_146] : memref<1x32xf32, #tpu.memory_space<vmem>>, vector<1x32xf32>
    %204 = arith.addf %202, %203 : vector<1x32xf32>
    %cst_147 = arith.constant 0.000000e+00 : f32
    %205 = vector.broadcast %cst_147 : f32 to vector<1x32xf32>
    %206 = arith.maximumf %204, %205 : vector<1x32xf32>
    %c0_148 = arith.constant 0 : index
    %c0_149 = arith.constant 0 : index
    %207 = vector.load %arg28[%c0_148, %c0_149] : memref<32x1xf32, #tpu.memory_space<vmem>>, vector<32x1xf32>
    %cst_150 = arith.constant dense<0.000000e+00> : vector<1x1xf32>
    %208 = tpu.matmul %206, %207, %cst_150 {dimension_numbers = #tpu.dot_dimension_numbers<[1], [0], [0], [1], [0, 0, 1, 1], [], []>} : vector<1x32xf32>, vector<32x1xf32>, vector<1x1xf32> -> vector<1x1xf32>
    %c0_151 = arith.constant 0 : index
    %c0_152 = arith.constant 0 : index
    %209 = vector.load %arg29[%c0_151, %c0_152] : memref<1x1xf32, #tpu.memory_space<vmem>>, vector<1x1xf32>
    %210 = arith.addf %208, %209 : vector<1x1xf32>
    %cst_153 = arith.constant 0.000000e+00 : f32
    %211 = vector.broadcast %cst_153 : f32 to vector<1x1xf32>
    %212 = arith.maximumf %210, %211 : vector<1x1xf32>
    %cst_154 = arith.constant 1.000000e-01 : f32
    %213 = vector.broadcast %cst_154 : f32 to vector<1x1xf32>
    %214 = arith.mulf %212, %213 : vector<1x1xf32>
    %c0_155 = arith.constant 0 : index
    %c0_156 = arith.constant 0 : index
    %215 = vector.load %arg30[%c0_155, %c0_156] : memref<2x1xf32, #tpu.memory_space<vmem>>, vector<1x1xf32>
    tpu.vector_store %arg30[%c0_155, %c0_156], %214 {strides = array<i32>} : memref<2x1xf32, #tpu.memory_space<vmem>>, vector<1x1xf32>,
    %216 = vector.extract_strided_slice %85 {offsets = [8, 0], sizes = [6, 32], strides = [1, 1]} : vector<16x32xf32> to vector<6x32xf32>
    %217 = vector.extract_strided_slice %88 {offsets = [9, 0], sizes = [6, 32], strides = [1, 1]} : vector<16x32xf32> to vector<6x32xf32>
    %218 = arith.addf %216, %217 : vector<6x32xf32>
    %219 = vector.extract_strided_slice %91 {offsets = [10, 0], sizes = [6, 32], strides = [1, 1]} : vector<16x32xf32> to vector<6x32xf32>
    %220 = arith.addf %218, %219 : vector<6x32xf32>
    %c0_157 = arith.constant 0 : index
    %c0_158 = arith.constant 0 : index
    %221 = vector.load %arg13[%c0_157, %c0_158] : memref<1x32xf32, #tpu.memory_space<vmem>>, vector<1x32xf32>
    %222 = vector.broadcast %221 : vector<1x32xf32> to vector<6x32xf32>
    %223 = arith.addf %220, %222 : vector<6x32xf32>
    %cst_159 = arith.constant 0.000000e+00 : f32
    %224 = vector.broadcast %cst_159 : f32 to vector<6x32xf32>
    %225 = arith.maximumf %223, %224 : vector<6x32xf32>
    %cst_160 = arith.constant dense<0xFF800000> : vector<32xf32>
    %226 = vector.multi_reduction <maximumf>, %225, %cst_160 [0] : vector<6x32xf32> to vector<32xf32>
    %227 = vector.shape_cast %226 : vector<32xf32> to vector<1x32xf32>
    %c0_161 = arith.constant 0 : index
    %c0_162 = arith.constant 0 : index
    %228 = vector.load %arg14[%c0_161, %c0_162] : memref<32x32xf32, #tpu.memory_space<vmem>>, vector<32x32xf32>
    %cst_163 = arith.constant dense<0.000000e+00> : vector<1x32xf32>
    %229 = tpu.matmul %227, %228, %cst_163 {dimension_numbers = #tpu.dot_dimension_numbers<[1], [0], [0], [1], [0, 0, 1, 1], [], []>} : vector<1x32xf32>, vector<32x32xf32>, vector<1x32xf32> -> vector<1x32xf32>
    %c0_164 = arith.constant 0 : index
    %c0_165 = arith.constant 0 : index
    %230 = vector.load %arg15[%c0_164, %c0_165] : memref<1x32xf32, #tpu.memory_space<vmem>>, vector<1x32xf32>
    %231 = arith.addf %229, %230 : vector<1x32xf32>
    %cst_166 = arith.constant 0.000000e+00 : f32
    %232 = vector.broadcast %cst_166 : f32 to vector<1x32xf32>
    %233 = arith.maximumf %231, %232 : vector<1x32xf32>
    %234 = vector.extract_strided_slice %94 {offsets = [16, 0], sizes = [14, 32], strides = [1, 1]} : vector<32x32xf32> to vector<14x32xf32>
    %235 = vector.extract_strided_slice %97 {offsets = [17, 0], sizes = [14, 32], strides = [1, 1]} : vector<32x32xf32> to vector<14x32xf32>
    %236 = arith.addf %234, %235 : vector<14x32xf32>
    %237 = vector.extract_strided_slice %100 {offsets = [18, 0], sizes = [14, 32], strides = [1, 1]} : vector<32x32xf32> to vector<14x32xf32>
    %238 = arith.addf %236, %237 : vector<14x32xf32>
    %c0_167 = arith.constant 0 : index
    %c0_168 = arith.constant 0 : index
    %239 = vector.load %arg17[%c0_167, %c0_168] : memref<1x32xf32, #tpu.memory_space<vmem>>, vector<1x32xf32>
    %240 = vector.broadcast %239 : vector<1x32xf32> to vector<14x32xf32>
    %241 = arith.addf %238, %240 : vector<14x32xf32>
    %cst_169 = arith.constant 0.000000e+00 : f32
    %242 = vector.broadcast %cst_169 : f32 to vector<14x32xf32>
    %243 = arith.maximumf %241, %242 : vector<14x32xf32>
    %244 = vector.extract_strided_slice %243 {offsets = [0, 0], sizes = [13, 32], strides = [1, 1]} : vector<14x32xf32> to vector<13x32xf32>
    %245 = vector.extract_strided_slice %243 {offsets = [1, 0], sizes = [13, 32], strides = [1, 1]} : vector<14x32xf32> to vector<13x32xf32>
    %246 = arith.maximumf %244, %245 : vector<13x32xf32>
    %247 = vector.extract_strided_slice %246 {offsets = [0, 0], sizes = [11, 32], strides = [1, 1]} : vector<13x32xf32> to vector<11x32xf32>
    %248 = vector.extract_strided_slice %246 {offsets = [2, 0], sizes = [11, 32], strides = [1, 1]} : vector<13x32xf32> to vector<11x32xf32>
    %249 = arith.maximumf %247, %248 : vector<11x32xf32>
    %250 = vector.extract_strided_slice %249 {offsets = [0, 0], sizes = [7, 32], strides = [1, 1]} : vector<11x32xf32> to vector<7x32xf32>
    %251 = vector.extract_strided_slice %249 {offsets = [4, 0], sizes = [7, 32], strides = [1, 1]} : vector<11x32xf32> to vector<7x32xf32>
    %252 = arith.maximumf %250, %251 : vector<7x32xf32>
    %c0_170 = arith.constant 0 : index
    %c0_171 = arith.constant 0 : index
    %253 = vector.load %arg18[%c0_170, %c0_171] : memref<32x32xf32, #tpu.memory_space<vmem>>, vector<32x32xf32>
    %cst_172 = arith.constant dense<0.000000e+00> : vector<7x32xf32>
    %254 = tpu.matmul %252, %253, %cst_172 {dimension_numbers = #tpu.dot_dimension_numbers<[1], [0], [0], [1], [0, 0, 1, 1], [], []>} : vector<7x32xf32>, vector<32x32xf32>, vector<7x32xf32> -> vector<7x32xf32>
    %c0_173 = arith.constant 0 : index
    %c0_174 = arith.constant 0 : index
    %255 = vector.load %arg19[%c0_173, %c0_174] : memref<1x32xf32, #tpu.memory_space<vmem>>, vector<1x32xf32>
    %256 = vector.broadcast %255 : vector<1x32xf32> to vector<7x32xf32>
    %257 = arith.addf %254, %256 : vector<7x32xf32>
    %cst_175 = arith.constant 0.000000e+00 : f32
    %258 = vector.broadcast %cst_175 : f32 to vector<7x32xf32>
    %259 = arith.maximumf %257, %258 : vector<7x32xf32>
    %260 = vector.broadcast %233 : vector<1x32xf32> to vector<7x32xf32>
    %261 = arith.mulf %259, %260 : vector<7x32xf32>
    %cst_176 = arith.constant 0.000000e+00 : f32
    %262 = vector.broadcast %cst_176 : f32 to vector<1x32xf32>
    %263 = vector.extract_strided_slice %261 {offsets = [0, 0], sizes = [1, 32], strides = [1, 1]} : vector<7x32xf32> to vector<1x32xf32>
    %c0_177 = arith.constant 0 : index
    %c0_178 = arith.constant 0 : index
    %c0_179 = arith.constant 0 : index
    %264 = vector.load %arg20[%c0_177, %c0_178, %c0_179] : memref<7x32x32xf32, #tpu.memory_space<vmem>>, vector<1x32x32xf32>
    %265 = vector.shape_cast %264 : vector<1x32x32xf32> to vector<32x32xf32>
    %cst_180 = arith.constant dense<0.000000e+00> : vector<1x32xf32>
    %266 = tpu.matmul %263, %265, %cst_180 {dimension_numbers = #tpu.dot_dimension_numbers<[1], [0], [0], [1], [0, 0, 1, 1], [], []>} : vector<1x32xf32>, vector<32x32xf32>, vector<1x32xf32> -> vector<1x32xf32>
    %267 = arith.addf %262, %266 : vector<1x32xf32>
    %268 = vector.extract_strided_slice %261 {offsets = [1, 0], sizes = [1, 32], strides = [1, 1]} : vector<7x32xf32> to vector<1x32xf32>
    %c1_181 = arith.constant 1 : index
    %c0_182 = arith.constant 0 : index
    %c0_183 = arith.constant 0 : index
    %269 = vector.load %arg20[%c1_181, %c0_182, %c0_183] : memref<7x32x32xf32, #tpu.memory_space<vmem>>, vector<1x32x32xf32>
    %270 = vector.shape_cast %269 : vector<1x32x32xf32> to vector<32x32xf32>
    %cst_184 = arith.constant dense<0.000000e+00> : vector<1x32xf32>
    %271 = tpu.matmul %268, %270, %cst_184 {dimension_numbers = #tpu.dot_dimension_numbers<[1], [0], [0], [1], [0, 0, 1, 1], [], []>} : vector<1x32xf32>, vector<32x32xf32>, vector<1x32xf32> -> vector<1x32xf32>
    %272 = arith.addf %267, %271 : vector<1x32xf32>
    %273 = vector.extract_strided_slice %261 {offsets = [2, 0], sizes = [1, 32], strides = [1, 1]} : vector<7x32xf32> to vector<1x32xf32>
    %c2_185 = arith.constant 2 : index
    %c0_186 = arith.constant 0 : index
    %c0_187 = arith.constant 0 : index
    %274 = vector.load %arg20[%c2_185, %c0_186, %c0_187] : memref<7x32x32xf32, #tpu.memory_space<vmem>>, vector<1x32x32xf32>
    %275 = vector.shape_cast %274 : vector<1x32x32xf32> to vector<32x32xf32>
    %cst_188 = arith.constant dense<0.000000e+00> : vector<1x32xf32>
    %276 = tpu.matmul %273, %275, %cst_188 {dimension_numbers = #tpu.dot_dimension_numbers<[1], [0], [0], [1], [0, 0, 1, 1], [], []>} : vector<1x32xf32>, vector<32x32xf32>, vector<1x32xf32> -> vector<1x32xf32>
    %277 = arith.addf %272, %276 : vector<1x32xf32>
    %278 = vector.extract_strided_slice %261 {offsets = [3, 0], sizes = [1, 32], strides = [1, 1]} : vector<7x32xf32> to vector<1x32xf32>
    %c3_189 = arith.constant 3 : index
    %c0_190 = arith.constant 0 : index
    %c0_191 = arith.constant 0 : index
    %279 = vector.load %arg20[%c3_189, %c0_190, %c0_191] : memref<7x32x32xf32, #tpu.memory_space<vmem>>, vector<1x32x32xf32>
    %280 = vector.shape_cast %279 : vector<1x32x32xf32> to vector<32x32xf32>
    %cst_192 = arith.constant dense<0.000000e+00> : vector<1x32xf32>
    %281 = tpu.matmul %278, %280, %cst_192 {dimension_numbers = #tpu.dot_dimension_numbers<[1], [0], [0], [1], [0, 0, 1, 1], [], []>} : vector<1x32xf32>, vector<32x32xf32>, vector<1x32xf32> -> vector<1x32xf32>
    %282 = arith.addf %277, %281 : vector<1x32xf32>
    %283 = vector.extract_strided_slice %261 {offsets = [4, 0], sizes = [1, 32], strides = [1, 1]} : vector<7x32xf32> to vector<1x32xf32>
    %c4_193 = arith.constant 4 : index
    %c0_194 = arith.constant 0 : index
    %c0_195 = arith.constant 0 : index
    %284 = vector.load %arg20[%c4_193, %c0_194, %c0_195] : memref<7x32x32xf32, #tpu.memory_space<vmem>>, vector<1x32x32xf32>
    %285 = vector.shape_cast %284 : vector<1x32x32xf32> to vector<32x32xf32>
    %cst_196 = arith.constant dense<0.000000e+00> : vector<1x32xf32>
    %286 = tpu.matmul %283, %285, %cst_196 {dimension_numbers = #tpu.dot_dimension_numbers<[1], [0], [0], [1], [0, 0, 1, 1], [], []>} : vector<1x32xf32>, vector<32x32xf32>, vector<1x32xf32> -> vector<1x32xf32>
    %287 = arith.addf %282, %286 : vector<1x32xf32>
    %288 = vector.extract_strided_slice %261 {offsets = [5, 0], sizes = [1, 32], strides = [1, 1]} : vector<7x32xf32> to vector<1x32xf32>
    %c5_197 = arith.constant 5 : index
    %c0_198 = arith.constant 0 : index
    %c0_199 = arith.constant 0 : index
    %289 = vector.load %arg20[%c5_197, %c0_198, %c0_199] : memref<7x32x32xf32, #tpu.memory_space<vmem>>, vector<1x32x32xf32>
    %290 = vector.shape_cast %289 : vector<1x32x32xf32> to vector<32x32xf32>
    %cst_200 = arith.constant dense<0.000000e+00> : vector<1x32xf32>
    %291 = tpu.matmul %288, %290, %cst_200 {dimension_numbers = #tpu.dot_dimension_numbers<[1], [0], [0], [1], [0, 0, 1, 1], [], []>} : vector<1x32xf32>, vector<32x32xf32>, vector<1x32xf32> -> vector<1x32xf32>
    %292 = arith.addf %287, %291 : vector<1x32xf32>
    %293 = vector.extract_strided_slice %261 {offsets = [6, 0], sizes = [1, 32], strides = [1, 1]} : vector<7x32xf32> to vector<1x32xf32>
    %c6_201 = arith.constant 6 : index
    %c0_202 = arith.constant 0 : index
    %c0_203 = arith.constant 0 : index
    %294 = vector.load %arg20[%c6_201, %c0_202, %c0_203] : memref<7x32x32xf32, #tpu.memory_space<vmem>>, vector<1x32x32xf32>
    %295 = vector.shape_cast %294 : vector<1x32x32xf32> to vector<32x32xf32>
    %cst_204 = arith.constant dense<0.000000e+00> : vector<1x32xf32>
    %296 = tpu.matmul %293, %295, %cst_204 {dimension_numbers = #tpu.dot_dimension_numbers<[1], [0], [0], [1], [0, 0, 1, 1], [], []>} : vector<1x32xf32>, vector<32x32xf32>, vector<1x32xf32> -> vector<1x32xf32>
    %297 = arith.addf %292, %296 : vector<1x32xf32>
    %c0_205 = arith.constant 0 : index
    %c0_206 = arith.constant 0 : index
    %298 = vector.load %arg21[%c0_205, %c0_206] : memref<1x32xf32, #tpu.memory_space<vmem>>, vector<1x32xf32>
    %299 = arith.addf %297, %298 : vector<1x32xf32>
    %cst_207 = arith.constant 0.000000e+00 : f32
    %300 = vector.broadcast %cst_207 : f32 to vector<1x32xf32>
    %301 = arith.maximumf %299, %300 : vector<1x32xf32>
    %c0_208 = arith.constant 0 : index
    %c0_209 = arith.constant 0 : index
    %302 = vector.load %arg22[%c0_208, %c0_209] : memref<32x32xf32, #tpu.memory_space<vmem>>, vector<32x32xf32>
    %cst_210 = arith.constant dense<0.000000e+00> : vector<1x32xf32>
    %303 = tpu.matmul %301, %302, %cst_210 {dimension_numbers = #tpu.dot_dimension_numbers<[1], [0], [0], [1], [0, 0, 1, 1], [], []>} : vector<1x32xf32>, vector<32x32xf32>, vector<1x32xf32> -> vector<1x32xf32>
    %c0_211 = arith.constant 0 : index
    %c0_212 = arith.constant 0 : index
    %304 = vector.load %arg23[%c0_211, %c0_212] : memref<1x32xf32, #tpu.memory_space<vmem>>, vector<1x32xf32>
    %305 = arith.addf %303, %304 : vector<1x32xf32>
    %cst_213 = arith.constant 0.000000e+00 : f32
    %306 = vector.broadcast %cst_213 : f32 to vector<1x32xf32>
    %307 = arith.maximumf %305, %306 : vector<1x32xf32>
    %308 = vector.extract_strided_slice %82 {offsets = [1, 0], sizes = [1, 32], strides = [1, 1]} : vector<2x32xf32> to vector<1x32xf32>
    %309 = arith.addf %308, %307 : vector<1x32xf32>
    %c0_214 = arith.constant 0 : index
    %c0_215 = arith.constant 0 : index
    %310 = vector.load %arg24[%c0_214, %c0_215] : memref<32x32xf32, #tpu.memory_space<vmem>>, vector<32x32xf32>
    %cst_216 = arith.constant dense<0.000000e+00> : vector<1x32xf32>
    %311 = tpu.matmul %309, %310, %cst_216 {dimension_numbers = #tpu.dot_dimension_numbers<[1], [0], [0], [1], [0, 0, 1, 1], [], []>} : vector<1x32xf32>, vector<32x32xf32>, vector<1x32xf32> -> vector<1x32xf32>
    %c0_217 = arith.constant 0 : index
    %c0_218 = arith.constant 0 : index
    %312 = vector.load %arg25[%c0_217, %c0_218] : memref<1x32xf32, #tpu.memory_space<vmem>>, vector<1x32xf32>
    %313 = arith.addf %311, %312 : vector<1x32xf32>
    %cst_219 = arith.constant 0.000000e+00 : f32
    %314 = vector.broadcast %cst_219 : f32 to vector<1x32xf32>
    %315 = arith.maximumf %313, %314 : vector<1x32xf32>
    %c0_220 = arith.constant 0 : index
    %c0_221 = arith.constant 0 : index
    %316 = vector.load %arg26[%c0_220, %c0_221] : memref<32x32xf32, #tpu.memory_space<vmem>>, vector<32x32xf32>
    %cst_222 = arith.constant dense<0.000000e+00> : vector<1x32xf32>
    %317 = tpu.matmul %315, %316, %cst_222 {dimension_numbers = #tpu.dot_dimension_numbers<[1], [0], [0], [1], [0, 0, 1, 1], [], []>} : vector<1x32xf32>, vector<32x32xf32>, vector<1x32xf32> -> vector<1x32xf32>
    %c0_223 = arith.constant 0 : index
    %c0_224 = arith.constant 0 : index
    %318 = vector.load %arg27[%c0_223, %c0_224] : memref<1x32xf32, #tpu.memory_space<vmem>>, vector<1x32xf32>
    %319 = arith.addf %317, %318 : vector<1x32xf32>
    %cst_225 = arith.constant 0.000000e+00 : f32
    %320 = vector.broadcast %cst_225 : f32 to vector<1x32xf32>
    %321 = arith.maximumf %319, %320 : vector<1x32xf32>
    %c0_226 = arith.constant 0 : index
    %c0_227 = arith.constant 0 : index
    %322 = vector.load %arg28[%c0_226, %c0_227] : memref<32x1xf32, #tpu.memory_space<vmem>>, vector<32x1xf32>
    %cst_228 = arith.constant dense<0.000000e+00> : vector<1x1xf32>
    %323 = tpu.matmul %321, %322, %cst_228 {dimension_numbers = #tpu.dot_dimension_numbers<[1], [0], [0], [1], [0, 0, 1, 1], [], []>} : vector<1x32xf32>, vector<32x1xf32>, vector<1x1xf32> -> vector<1x1xf32>
    %c0_229 = arith.constant 0 : index
    %c0_230 = arith.constant 0 : index
    %324 = vector.load %arg29[%c0_229, %c0_230] : memref<1x1xf32, #tpu.memory_space<vmem>>, vector<1x1xf32>
    %325 = arith.addf %323, %324 : vector<1x1xf32>
    %cst_231 = arith.constant 0.000000e+00 : f32
    %326 = vector.broadcast %cst_231 : f32 to vector<1x1xf32>
    %327 = arith.maximumf %325, %326 : vector<1x1xf32>
    %cst_232 = arith.constant 1.000000e-01 : f32
    %328 = vector.broadcast %cst_232 : f32 to vector<1x1xf32>
    %329 = arith.mulf %327, %328 : vector<1x1xf32>
    %c1_233 = arith.constant 1 : index
    %c0_234 = arith.constant 0 : index
    %330 = vector.load %arg30[%c1_233, %c0_234] : memref<2x1xf32, #tpu.memory_space<vmem>>, vector<1x1xf32>
    tpu.vector_store %arg30[%c1_233, %c0_234], %329 {strides = array<i32>} : memref<2x1xf32, #tpu.memory_space<vmem>>, vector<1x1xf32>,
    return
  }
}

</mosaic_0001>

<llo_original>
// kernel: duet_forward.1
$region0: #{duet_forward.1}
  #allocation0 [shape = 'u32[]', space=smem, size = 0x4, offset = 0x4, fixed_abs, tag = 'smem constant byte address 0x4 - core index']
  #allocation1 [shape = 'u32[72,128]{1,0:T(1,128)}', space=vmem, size = 0x9000, scoped, tag = 'internal scratch']
  #allocation2 [shape = 'f32[1,1]{1,0:T(1,128)S(1)}', space=vmem, size = 0x200, scoped, tag = 'scoped memory for duet_forward.1']
  %s0 = inlined_call_operand.smem [shape: u32[31], index: -1, kind: input, shape index: {}]
  %s1 = sld [smem:[%s0]]
  %s2 = scalar_lea.smem %s0, 1
  %s3 = sld [smem:[%s2]]
  %s4 = scalar_lea.smem %s0, 2
  %s5 = sld [smem:[%s4]]
  %s6 = scalar_lea.smem %s0, 3
  %s7 = sld [smem:[%s6]]
  %s8 = scalar_lea.smem %s0, 4
  %s9 = sld [smem:[%s8]]
  %s10 = scalar_lea.smem %s0, 5
  %s11 = sld [smem:[%s10]]
  %s12 = scalar_lea.smem %s0, 6
  %s13 = sld [smem:[%s12]]
  %s14 = scalar_lea.smem %s0, 7
  %s15 = sld [smem:[%s14]]
  %s16 = scalar_lea.smem %s0, 8
  %s17 = sld [smem:[%s16]]
  %s18 = scalar_lea.smem %s0, 9
  %s19 = sld [smem:[%s18]]
  %s20 = scalar_lea.smem %s0, 10
  %s21 = sld [smem:[%s20]]
  %s22 = scalar_lea.smem %s0, 11
  %s23 = sld [smem:[%s22]]
  %s24 = scalar_lea.smem %s0, 12
  %s25 = sld [smem:[%s24]]
  %s26 = scalar_lea.smem %s0, 13
  %s27 = sld [smem:[%s26]]
  %s28 = scalar_lea.smem %s0, 14
  %s29 = sld [smem:[%s28]]
  %s30 = scalar_lea.smem %s0, 15
  %s31 = sld [smem:[%s30]]
  %s32 = scalar_lea.smem %s0, 16
  %s33 = sld [smem:[%s32]]
  %s34 = scalar_lea.smem %s0, 17
  %s35 = sld [smem:[%s34]]
  %s36 = scalar_lea.smem %s0, 18
  %s37 = sld [smem:[%s36]]
  %s38 = scalar_lea.smem %s0, 19
  %s39 = sld [smem:[%s38]]
  %s40 = scalar_lea.smem %s0, 20
  %s41 = sld [smem:[%s40]]
  %s42 = scalar_lea.smem %s0, 21
  %s43 = sld [smem:[%s42]]
  %s44 = scalar_lea.smem %s0, 22
  %s45 = sld [smem:[%s44]]
  %s46 = scalar_lea.smem %s0, 23
  %s47 = sld [smem:[%s46]]
  %s48 = scalar_lea.smem %s0, 24
  %s49 = sld [smem:[%s48]]
  %s50 = scalar_lea.smem %s0, 25
  %s51 = sld [smem:[%s50]]
  %s52 = scalar_lea.smem %s0, 26
  %s53 = sld [smem:[%s52]]
  %s54 = scalar_lea.smem %s0, 27
  %s55 = sld [smem:[%s54]]
  %s56 = scalar_lea.smem %s0, 28
  %s57 = sld [smem:[%s56]]
  %s58 = scalar_lea.smem %s0, 29
  %s59 = sld [smem:[%s58]]
  %s60 = scalar_lea.smem %s0, 30
  %s61 = sld [smem:[%s60]]
  %s62 = sld [smem:[#allocation0]]
  $region210: #{duet_forward.1} parent=0
    _
  %s64 = ssub.s32 1, %s62
  %s65 = scalar_select 0, %s64, %s62
  %v66 = vstv %s59
  %67 = vst [vmem:[#allocation2] sm:$0x1] %v66
  $region1: #{duet_forward.1} parent=0
    #allocation3 [shape = 'u8[8192]{0}', space=vmem, size = 0x2000, scoped, tag = 'input window, operand 6, single buffered']
    #allocation4 [shape = 's32[1]{0}', space=sflag, size = 0x4, scoped, tag = 'scoped memory for duet_forward.1']
    #allocation5 [shape = 'u8[512]{0}', space=vmem, size = 0x400, scoped, tag = 'input window, operand 7, single buffered']
    #allocation6 [shape = 's32[1]{0}', space=sflag, size = 0x4, scoped, tag = 'scoped memory for duet_forward.1']
    #allocation7 [shape = 'u8[512]{0}', space=vmem, size = 0x400, scoped, tag = 'input window, operand 9, single buffered']
    #allocation8 [shape = 'u8[512]{0}', space=vmem, size = 0x400, scoped, tag = 'input window, operand 11, single buffered']
    #allocation9 [shape = 's32[1]{0}', space=sflag, size = 0x4, scoped, tag = 'scoped memory for duet_forward.1']
    #allocation10 [shape = 'u8[49152]{0}', space=vmem, size = 0xc000, scoped, tag = 'input window, operand 12, single buffered']
    #allocation11 [shape = 'u8[512]{0}', space=vmem, size = 0x400, scoped, tag = 'input window, operand 13, single buffered']
    #allocation12 [shape = 's32[1]{0}', space=sflag, size = 0x4, scoped, tag = 'scoped memory for duet_forward.1']
    #allocation13 [shape = 'u8[16384]{0}', space=vmem, size = 0x4000, scoped, tag = 'input window, operand 14, single buffered']
    #allocation14 [shape = 'u8[512]{0}', space=vmem, size = 0x400, scoped, tag = 'input window, operand 15, single buffered']
    #allocation15 [shape = 's32[1]{0}', space=sflag, size = 0x4, scoped, tag = 'scoped memory for duet_forward.1']
    #allocation16 [shape = 'u8[49152]{0}', space=vmem, size = 0xc000, scoped, tag = 'input window, operand 16, single buffered']
    #allocation17 [shape = 'u8[512]{0}', space=vmem, size = 0x400, scoped, tag = 'input window, operand 17, single buffered']
    #allocation18 [shape = 's32[1]{0}', space=sflag, size = 0x4, scoped, tag = 'scoped memory for duet_forward.1']
    #allocation19 [shape = 'u8[16384]{0}', space=vmem, size = 0x4000, scoped, tag = 'input window, operand 18, single buffered']
    #allocation20 [shape = 'u8[512]{0}', space=vmem, size = 0x400, scoped, tag = 'input window, operand 19, single buffered']
    #allocation21 [shape = 's32[1]{0}', space=sflag, size = 0x4, scoped, tag = 'scoped memory for duet_forward.1']
    #allocation22 [shape = 'u8[114688]{0}', space=vmem, size = 0x1c000, scoped, tag = 'input window, operand 20, single buffered']
    #allocation23 [shape = 'u8[512]{0}', space=vmem, size = 0x400, scoped, tag = 'input window, operand 21, single buffered']
    #allocation24 [shape = 's32[1]{0}', space=sflag, size = 0x4, scoped, tag = 'scoped memory for duet_forward.1']
    #allocation25 [shape = 'u8[16384]{0}', space=vmem, size = 0x4000, scoped, tag = 'input window, operand 22, single buffered']
    #allocation26 [shape = 'u8[512]{0}', space=vmem, size = 0x400, scoped, tag = 'input window, operand 23, single buffered']
    #allocation27 [shape = 's32[1]{0}', space=sflag, size = 0x4, scoped, tag = 'scoped memory for duet_forward.1']
    #allocation28 [shape = 'u8[16384]{0}', space=vmem, size = 0x4000, scoped, tag = 'input window, operand 24, single buffered']
    #allocation29 [shape = 'u8[512]{0}', space=vmem, size = 0x400, scoped, tag = 'input window, operand 25, single buffered']
    #allocation30 [shape = 's32[1]{0}', space=sflag, size = 0x4, scoped, tag = 'scoped memory for duet_forward.1']
    #allocation31 [shape = 'u8[16384]{0}', space=vmem, size = 0x4000, scoped, tag = 'input window, operand 26, single buffered']
    #allocation32 [shape = 'u8[512]{0}', space=vmem, size = 0x400, scoped, tag = 'input window, operand 27, single buffered']
    #allocation33 [shape = 's32[1]{0}', space=sflag, size = 0x4, scoped, tag = 'scoped memory for duet_forward.1']
    %68 = vsyncpa [#allocation4], 0
    %69 = vsyncpa [#allocation6], 0
    %70 = vsyncpa [#allocation9], 0
    %71 = vsyncpa [#allocation12], 0
    %72 = vsyncpa [#allocation15], 0
    %73 = vsyncpa [#allocation18], 0
    %74 = vsyncpa [#allocation21], 0
    %75 = vsyncpa [#allocation24], 0
    %76 = vsyncpa [#allocation27], 0
    %77 = vsyncpa [#allocation30], 0
    %78 = vsyncpa [#allocation33], 0
    // Predicated region
    $region2: #{duet_forward.1} parent=1 // pred_check
      _
    $region3: #{duet_forward.1} parent=1 // pred_check_branch
      %80 = sbr.rel (0) target = $region5
    $region4: #{duet_forward.1} parent=1 // pred_region
      _
    $region5: #{duet_forward.1} parent=1 // pred_fallthru
      _
    // Predicated region
    $region6: #{duet_forward.1} parent=1 // pred_check
      _
    $region7: #{duet_forward.1} parent=1 // pred_check_branch
      %82 = sbr.rel (0) target = $region9
    $region8: #{duet_forward.1} parent=1 // pred_region
      _
    $region9: #{duet_forward.1} parent=1 // pred_fallthru
      _
    // Predicated region
    $region10: #{duet_forward.1} parent=1 // pred_check
      _
    $region11: #{duet_forward.1} parent=1 // pred_check_branch
      %84 = sbr.rel (0) target = $region13
    $region12: #{duet_forward.1} parent=1 // pred_region
      _
    $region13: #{duet_forward.1} parent=1 // pred_fallthru
      _
    // Predicated region
    $region14: #{duet_forward.1} parent=1 // pred_check
      _
    $region15: #{duet_forward.1} parent=1 // pred_check_branch
      %86 = sbr.rel (0) target = $region17
    $region16: #{duet_forward.1} parent=1 // pred_region
      _
    $region17: #{duet_forward.1} parent=1 // pred_fallthru
      _
    // Predicated region
    $region18: #{duet_forward.1} parent=1 // pred_check
      _
    $region19: #{duet_forward.1} parent=1 // pred_check_branch
      %88 = sbr.rel (0) target = $region21
    $region20: #{duet_forward.1} parent=1 // pred_region
      _
    $region21: #{duet_forward.1} parent=1 // pred_fallthru
      _
    // Predicated region
    $region22: #{duet_forward.1} parent=1 // pred_check
      _
    $region23: #{duet_forward.1} parent=1 // pred_check_branch
      %90 = sbr.rel (0) target = $region25
    $region24: #{duet_forward.1} parent=1 // pred_region
      _
    $region25: #{duet_forward.1} parent=1 // pred_fallthru
      _
    // Predicated region
    $region26: #{duet_forward.1} parent=1 // pred_check
      _
    $region27: #{duet_forward.1} parent=1 // pred_check_branch
      %92 = sbr.rel (0) target = $region29
    $region28: #{duet_forward.1} parent=1 // pred_region
      %94 = vsyncadd [#allocation4], 0
      %s95 = sshll.u32 %s13, 4
      %s96 = int_to_ptr.hbm [resolvable:$true] %s95
      %s97 = sshll.u32 [#allocation3], 4
      %s98 = int_to_ptr.vmem [resolvable:$true] %s97
      %103 = dma.hbm_to_vmem [thread:$0]  %s96, 256, %s98, [#allocation4], 128, 128, 8
    $region29: #{duet_forward.1} parent=1 // pred_fallthru
      _
    // Predicated region
    $region30: #{duet_forward.1} parent=1 // pred_check
      _
    $region31: #{duet_forward.1} parent=1 // pred_check_branch
      %105 = sbr.rel (0) target = $region33
    $region32: #{duet_forward.1} parent=1 // pred_region
      %107 = vsyncadd [#allocation6], 0
      %s109 = sshll.u32 %s15, 4
      %s110 = int_to_ptr.hbm [resolvable:$true] %s109
      %s111 = sshll.u32 [#allocation5], 4
      %s112 = int_to_ptr.vmem [resolvable:$true] %s111
      %114 = dma.hbm_to_vmem [thread:$0]  %s110, 16, %s112, [#allocation6]
    $region33: #{duet_forward.1} parent=1 // pred_fallthru
      _
    // Predicated region
    $region34: #{duet_forward.1} parent=1 // pred_check
      _
    $region35: #{duet_forward.1} parent=1 // pred_check_branch
      %116 = sbr.rel (0) target = $region37
    $region36: #{duet_forward.1} parent=1 // pred_region
      _
    $region37: #{duet_forward.1} parent=1 // pred_fallthru
      _
    // Predicated region
    $region38: #{duet_forward.1} parent=1 // pred_check
      _
    $region39: #{duet_forward.1} parent=1 // pred_check_branch
      %118 = sbr.rel (0) target = $region41
    $region40: #{duet_forward.1} parent=1 // pred_region
      %120 = vsyncadd [#allocation6], 0
      %s122 = sshll.u32 %s19, 4
      %s123 = int_to_ptr.hbm [resolvable:$true] %s122
      %s124 = sshll.u32 [#allocation7], 4
      %s125 = int_to_ptr.vmem [resolvable:$true] %s124
      %127 = dma.hbm_to_vmem [thread:$0]  %s123, 16, %s125, [#allocation6]
    $region41: #{duet_forward.1} parent=1 // pred_fallthru
      _
    // Predicated region
    $region42: #{duet_forward.1} parent=1 // pred_check
      _
    $region43: #{duet_forward.1} parent=1 // pred_check_branch
      %129 = sbr.rel (0) target = $region45
    $region44: #{duet_forward.1} parent=1 // pred_region
      _
    $region45: #{duet_forward.1} parent=1 // pred_fallthru
      _
    // Predicated region
    $region46: #{duet_forward.1} parent=1 // pred_check
      _
    $region47: #{duet_forward.1} parent=1 // pred_check_branch
      %131 = sbr.rel (0) target = $region49
    $region48: #{duet_forward.1} parent=1 // pred_region
      %133 = vsyncadd [#allocation9], 0
      %s135 = sshll.u32 %s23, 4
      %s136 = int_to_ptr.hbm [resolvable:$true] %s135
      %s137 = sshll.u32 [#allocation8], 4
      %s138 = int_to_ptr.vmem [resolvable:$true] %s137
      %140 = dma.hbm_to_vmem [thread:$0]  %s136, 16, %s138, [#allocation9]
    $region49: #{duet_forward.1} parent=1 // pred_fallthru
      _
    // Predicated region
    $region50: #{duet_forward.1} parent=1 // pred_check
      _
    $region51: #{duet_forward.1} parent=1 // pred_check_branch
      %142 = sbr.rel (0) target = $region53
    $region52: #{duet_forward.1} parent=1 // pred_region
      %144 = vsyncadd [#allocation9], 0
      %s145 = sshll.u32 %s25, 4
      %s146 = int_to_ptr.hbm [resolvable:$true] %s145
      %s147 = sshll.u32 [#allocation10], 4
      %s148 = int_to_ptr.vmem [resolvable:$true] %s147
      %153 = dma.hbm_to_vmem [thread:$0]  %s146, 1536, %s148, [#allocation9], 128, 128, 8
    $region53: #{duet_forward.1} parent=1 // pred_fallthru
      _
    // Predicated region
    $region54: #{duet_forward.1} parent=1 // pred_check
      _
    $region55: #{duet_forward.1} parent=1 // pred_check_branch
      %155 = sbr.rel (0) target = $region57
    $region56: #{duet_forward.1} parent=1 // pred_region
      %157 = vsyncadd [#allocation12], 0
      %s159 = sshll.u32 %s27, 4
      %s160 = int_to_ptr.hbm [resolvable:$true] %s159
      %s161 = sshll.u32 [#allocation11], 4
      %s162 = int_to_ptr.vmem [resolvable:$true] %s161
      %164 = dma.hbm_to_vmem [thread:$0]  %s160, 16, %s162, [#allocation12]
    $region57: #{duet_forward.1} parent=1 // pred_fallthru
      _
    // Predicated region
    $region58: #{duet_forward.1} parent=1 // pred_check
      _
    $region59: #{duet_forward.1} parent=1 // pred_check_branch
      %166 = sbr.rel (0) target = $region61
    $region60: #{duet_forward.1} parent=1 // pred_region
      %168 = vsyncadd [#allocation12], 0
      %s169 = sshll.u32 %s29, 4
      %s170 = int_to_ptr.hbm [resolvable:$true] %s169
      %s171 = sshll.u32 [#allocation13], 4
      %s172 = int_to_ptr.vmem [resolvable:$true] %s171
      %177 = dma.hbm_to_vmem [thread:$0]  %s170, 512, %s172, [#allocation12], 128, 128, 8
    $region61: #{duet_forward.1} parent=1 // pred_fallthru
      _
    // Predicated region
    $region62: #{duet_forward.1} parent=1 // pred_check
      _
    $region63: #{duet_forward.1} parent=1 // pred_check_branch
      %179 = sbr.rel (0) target = $region65
    $region64: #{duet_forward.1} parent=1 // pred_region
      %181 = vsyncadd [#allocation15], 0
      %s183 = sshll.u32 %s31, 4
      %s184 = int_to_ptr.hbm [resolvable:$true] %s183
      %s185 = sshll.u32 [#allocation14], 4
      %s186 = int_to_ptr.vmem [resolvable:$true] %s185
      %188 = dma.hbm_to_vmem [thread:$0]  %s184, 16, %s186, [#allocation15]
    $region65: #{duet_forward.1} parent=1 // pred_fallthru
      _
    // Predicated region
    $region66: #{duet_forward.1} parent=1 // pred_check
      _
    $region67: #{duet_forward.1} parent=1 // pred_check_branch
      %190 = sbr.rel (0) target = $region69
    $region68: #{duet_forward.1} parent=1 // pred_region
      %192 = vsyncadd [#allocation15], 0
      %s193 = sshll.u32 %s33, 4
      %s194 = int_to_ptr.hbm [resolvable:$true] %s193
      %s195 = sshll.u32 [#allocation16], 4
      %s196 = int_to_ptr.vmem [resolvable:$true] %s195
      %201 = dma.hbm_to_vmem [thread:$0]  %s194, 1536, %s196, [#allocation15], 128, 128, 8
    $region69: #{duet_forward.1} parent=1 // pred_fallthru
      _
    // Predicated region
    $region70: #{duet_forward.1} parent=1 // pred_check
      _
    $region71: #{duet_forward.1} parent=1 // pred_check_branch
      %203 = sbr.rel (0) target = $region73
    $region72: #{duet_forward.1} parent=1 // pred_region
      %205 = vsyncadd [#allocation18], 0
      %s207 = sshll.u32 %s35, 4
      %s208 = int_to_ptr.hbm [resolvable:$true] %s207
      %s209 = sshll.u32 [#allocation17], 4
      %s210 = int_to_ptr.vmem [resolvable:$true] %s209
      %212 = dma.hbm_to_vmem [thread:$0]  %s208, 16, %s210, [#allocation18]
    $region73: #{duet_forward.1} parent=1 // pred_fallthru
      _
    // Predicated region
    $region74: #{duet_forward.1} parent=1 // pred_check
      _
    $region75: #{duet_forward.1} parent=1 // pred_check_branch
      %214 = sbr.rel (0) target = $region77
    $region76: #{duet_forward.1} parent=1 // pred_region
      %216 = vsyncadd [#allocation18], 0
      %s217 = sshll.u32 %s37, 4
      %s218 = int_to_ptr.hbm [resolvable:$true] %s217
      %s219 = sshll.u32 [#allocation19], 4
      %s220 = int_to_ptr.vmem [resolvable:$true] %s219
      %225 = dma.hbm_to_vmem [thread:$0]  %s218, 512, %s220, [#allocation18], 128, 128, 8
    $region77: #{duet_forward.1} parent=1 // pred_fallthru
      _
    // Predicated region
    $region78: #{duet_forward.1} parent=1 // pred_check
      _
    $region79: #{duet_forward.1} parent=1 // pred_check_branch
      %227 = sbr.rel (0) target = $region81
    $region80: #{duet_forward.1} parent=1 // pred_region
      %229 = vsyncadd [#allocation21], 0
      %s231 = sshll.u32 %s39, 4
      %s232 = int_to_ptr.hbm [resolvable:$true] %s231
      %s233 = sshll.u32 [#allocation20], 4
      %s234 = int_to_ptr.vmem [resolvable:$true] %s233
      %236 = dma.hbm_to_vmem [thread:$0]  %s232, 16, %s234, [#allocation21]
    $region81: #{duet_forward.1} parent=1 // pred_fallthru
      _
    // Predicated region
    $region82: #{duet_forward.1} parent=1 // pred_check
      _
    $region83: #{duet_forward.1} parent=1 // pred_check_branch
      %238 = sbr.rel (0) target = $region85
    $region84: #{duet_forward.1} parent=1 // pred_region
      %240 = vsyncadd [#allocation21], 0
      %s241 = sshll.u32 %s41, 4
      %s242 = int_to_ptr.hbm [resolvable:$true] %s241
      %s243 = sshll.u32 [#allocation22], 4
      %s244 = int_to_ptr.vmem [resolvable:$true] %s243
      %249 = dma.hbm_to_vmem [thread:$0]  %s242, 3584, %s244, [#allocation21], 128, 128, 8
    $region85: #{duet_forward.1} parent=1 // pred_fallthru
      _
    // Predicated region
    $region86: #{duet_forward.1} parent=1 // pred_check
      _
    $region87: #{duet_forward.1} parent=1 // pred_check_branch
      %251 = sbr.rel (0) target = $region89
    $region88: #{duet_forward.1} parent=1 // pred_region
      %253 = vsyncadd [#allocation24], 0
      %s255 = sshll.u32 %s43, 4
      %s256 = int_to_ptr.hbm [resolvable:$true] %s255
      %s257 = sshll.u32 [#allocation23], 4
      %s258 = int_to_ptr.vmem [resolvable:$true] %s257
      %260 = dma.hbm_to_vmem [thread:$0]  %s256, 16, %s258, [#allocation24]
    $region89: #{duet_forward.1} parent=1 // pred_fallthru
      _
    // Predicated region
    $region90: #{duet_forward.1} parent=1 // pred_check
      _
    $region91: #{duet_forward.1} parent=1 // pred_check_branch
      %262 = sbr.rel (0) target = $region93
    $region92: #{duet_forward.1} parent=1 // pred_region
      %264 = vsyncadd [#allocation24], 0
      %s265 = sshll.u32 %s45, 4
      %s266 = int_to_ptr.hbm [resolvable:$true] %s265
      %s267 = sshll.u32 [#allocation25], 4
      %s268 = int_to_ptr.vmem [resolvable:$true] %s267
      %273 = dma.hbm_to_vmem [thread:$0]  %s266, 512, %s268, [#allocation24], 128, 128, 8
    $region93: #{duet_forward.1} parent=1 // pred_fallthru
      _
    // Predicated region
    $region94: #{duet_forward.1} parent=1 // pred_check
      _
    $region95: #{duet_forward.1} parent=1 // pred_check_branch
      %275 = sbr.rel (0) target = $region97
    $region96: #{duet_forward.1} parent=1 // pred_region
      %277 = vsyncadd [#allocation27], 0
      %s279 = sshll.u32 %s47, 4
      %s280 = int_to_ptr.hbm [resolvable:$true] %s279
      %s281 = sshll.u32 [#allocation26], 4
      %s282 = int_to_ptr.vmem [resolvable:$true] %s281
      %284 = dma.hbm_to_vmem [thread:$0]  %s280, 16, %s282, [#allocation27]
    $region97: #{duet_forward.1} parent=1 // pred_fallthru
      _
    // Predicated region
    $region98: #{duet_forward.1} parent=1 // pred_check
      _
    $region99: #{duet_forward.1} parent=1 // pred_check_branch
      %286 = sbr.rel (0) target = $region101
    $region100: #{duet_forward.1} parent=1 // pred_region
      %288 = vsyncadd [#allocation27], 0
      %s289 = sshll.u32 %s49, 4
      %s290 = int_to_ptr.hbm [resolvable:$true] %s289
      %s291 = sshll.u32 [#allocation28], 4
      %s292 = int_to_ptr.vmem [resolvable:$true] %s291
      %297 = dma.hbm_to_vmem [thread:$0]  %s290, 512, %s292, [#allocation27], 128, 128, 8
    $region101: #{duet_forward.1} parent=1 // pred_fallthru
      _
    // Predicated region
    $region102: #{duet_forward.1} parent=1 // pred_check
      _
    $region103: #{duet_forward.1} parent=1 // pred_check_branch
      %299 = sbr.rel (0) target = $region105
    $region104: #{duet_forward.1} parent=1 // pred_region
      %301 = vsyncadd [#allocation30], 0
      %s303 = sshll.u32 %s51, 4
      %s304 = int_to_ptr.hbm [resolvable:$true] %s303
      %s305 = sshll.u32 [#allocation29], 4
      %s306 = int_to_ptr.vmem [resolvable:$true] %s305
      %308 = dma.hbm_to_vmem [thread:$0]  %s304, 16, %s306, [#allocation30]
    $region105: #{duet_forward.1} parent=1 // pred_fallthru
      _
    // Predicated region
    $region106: #{duet_forward.1} parent=1 // pred_check
      _
    $region107: #{duet_forward.1} parent=1 // pred_check_branch
      %310 = sbr.rel (0) target = $region109
    $region108: #{duet_forward.1} parent=1 // pred_region
      %312 = vsyncadd [#allocation30], 0
      %s313 = sshll.u32 %s53, 4
      %s314 = int_to_ptr.hbm [resolvable:$true] %s313
      %s315 = sshll.u32 [#allocation31], 4
      %s316 = int_to_ptr.vmem [resolvable:$true] %s315
      %321 = dma.hbm_to_vmem [thread:$0]  %s314, 512, %s316, [#allocation30], 128, 128, 8
    $region109: #{duet_forward.1} parent=1 // pred_fallthru
      _
    // Predicated region
    $region110: #{duet_forward.1} parent=1 // pred_check
      _
    $region111: #{duet_forward.1} parent=1 // pred_check_branch
      %323 = sbr.rel (0) target = $region113
    $region112: #{duet_forward.1} parent=1 // pred_region
      %325 = vsyncadd [#allocation33], 0
      %s327 = sshll.u32 %s55, 4
      %s328 = int_to_ptr.hbm [resolvable:$true] %s327
      %s329 = sshll.u32 [#allocation32], 4
      %s330 = int_to_ptr.vmem [resolvable:$true] %s329
      %332 = dma.hbm_to_vmem [thread:$0]  %s328, 16, %s330, [#allocation33]
    $region113: #{duet_forward.1} parent=1 // pred_fallthru
      _
    // Predicated region
    $region114: #{duet_forward.1} parent=1 // pred_check
      _
    $region115: #{duet_forward.1} parent=1 // pred_check_branch
      %334 = sbr.rel (0) target = $region117
    $region116: #{duet_forward.1} parent=1 // pred_region
      _
    $region117: #{duet_forward.1} parent=1 // pred_fallthru
      _
    // Predicated region
    $region118: #{duet_forward.1} parent=1 // pred_check
      _
    $region119: #{duet_forward.1} parent=1 // pred_check_branch
      %336 = sbr.rel (0) target = $region121
    $region120: #{duet_forward.1} parent=1 // pred_region
      _
    $region121: #{duet_forward.1} parent=1 // pred_fallthru
      _
    // Predicated region
    $region122: #{duet_forward.1} parent=1 // pred_check
      _
    $region123: #{duet_forward.1} parent=1 // pred_check_branch
      %338 = sbr.rel (0) target = $region125
    $region124: #{duet_forward.1} parent=1 // pred_region
      %340 = dma.done [#allocation4], 256
    $region125: #{duet_forward.1} parent=1 // pred_fallthru
      _
    // Predicated region
    $region126: #{duet_forward.1} parent=1 // pred_check
      _
    $region127: #{duet_forward.1} parent=1 // pred_check_branch
      %342 = sbr.rel (0) target = $region129
    $region128: #{duet_forward.1} parent=1 // pred_region
      %344 = dma.done [#allocation6], 16
    $region129: #{duet_forward.1} parent=1 // pred_fallthru
      _
    // Predicated region
    $region130: #{duet_forward.1} parent=1 // pred_check
      _
    $region131: #{duet_forward.1} parent=1 // pred_check_branch
      %346 = sbr.rel (0) target = $region133
    $region132: #{duet_forward.1} parent=1 // pred_region
      %348 = dma.done [#allocation6], 16
    $region133: #{duet_forward.1} parent=1 // pred_fallthru
      _
    // Predicated region
    $region134: #{duet_forward.1} parent=1 // pred_check
      _
    $region135: #{duet_forward.1} parent=1 // pred_check_branch
      %350 = sbr.rel (0) target = $region137
    $region136: #{duet_forward.1} parent=1 // pred_region
      %352 = dma.done [#allocation9], 16
    $region137: #{duet_forward.1} parent=1 // pred_fallthru
      _
    // Predicated region
    $region138: #{duet_forward.1} parent=1 // pred_check
      _
    $region139: #{duet_forward.1} parent=1 // pred_check_branch
      %354 = sbr.rel (0) target = $region141
    $region140: #{duet_forward.1} parent=1 // pred_region
      %356 = dma.done [#allocation9], 1536
    $region141: #{duet_forward.1} parent=1 // pred_fallthru
      _
    // Predicated region
    $region142: #{duet_forward.1} parent=1 // pred_check
      _
    $region143: #{duet_forward.1} parent=1 // pred_check_branch
      %358 = sbr.rel (0) target = $region145
    $region144: #{duet_forward.1} parent=1 // pred_region
      %360 = dma.done [#allocation12], 16
    $region145: #{duet_forward.1} parent=1 // pred_fallthru
      _
    // Predicated region
    $region146: #{duet_forward.1} parent=1 // pred_check
      _
    $region147: #{duet_forward.1} parent=1 // pred_check_branch
      %362 = sbr.rel (0) target = $region149
    $region148: #{duet_forward.1} parent=1 // pred_region
      %364 = dma.done [#allocation12], 512
    $region149: #{duet_forward.1} parent=1 // pred_fallthru
      _
    // Predicated region
    $region150: #{duet_forward.1} parent=1 // pred_check
      _
    $region151: #{duet_forward.1} parent=1 // pred_check_branch
      %366 = sbr.rel (0) target = $region153
    $region152: #{duet_forward.1} parent=1 // pred_region
      %368 = dma.done [#allocation15], 16
    $region153: #{duet_forward.1} parent=1 // pred_fallthru
      _
    // Predicated region
    $region154: #{duet_forward.1} parent=1 // pred_check
      _
    $region155: #{duet_forward.1} parent=1 // pred_check_branch
      %370 = sbr.rel (0) target = $region157
    $region156: #{duet_forward.1} parent=1 // pred_region
      %372 = dma.done [#allocation15], 1536
    $region157: #{duet_forward.1} parent=1 // pred_fallthru
      _
    // Predicated region
    $region158: #{duet_forward.1} parent=1 // pred_check
      _
    $region159: #{duet_forward.1} parent=1 // pred_check_branch
      %374 = sbr.rel (0) target = $region161
    $region160: #{duet_forward.1} parent=1 // pred_region
      %376 = dma.done [#allocation18], 16
    $region161: #{duet_forward.1} parent=1 // pred_fallthru
      _
    // Predicated region
    $region162: #{duet_forward.1} parent=1 // pred_check
      _
    $region163: #{duet_forward.1} parent=1 // pred_check_branch
      %378 = sbr.rel (0) target = $region165
    $region164: #{duet_forward.1} parent=1 // pred_region
      %380 = dma.done [#allocation18], 512
    $region165: #{duet_forward.1} parent=1 // pred_fallthru
      _
    // Predicated region
    $region166: #{duet_forward.1} parent=1 // pred_check
      _
    $region167: #{duet_forward.1} parent=1 // pred_check_branch
      %382 = sbr.rel (0) target = $region169
    $region168: #{duet_forward.1} parent=1 // pred_region
      %384 = dma.done [#allocation21], 16
    $region169: #{duet_forward.1} parent=1 // pred_fallthru
      _
    // Predicated region
    $region170: #{duet_forward.1} parent=1 // pred_check
      _
    $region171: #{duet_forward.1} parent=1 // pred_check_branch
      %386 = sbr.rel (0) target = $region173
    $region172: #{duet_forward.1} parent=1 // pred_region
      %388 = dma.done [#allocation21], 3584
    $region173: #{duet_forward.1} parent=1 // pred_fallthru
      _
    // Predicated region
    $region174: #{duet_forward.1} parent=1 // pred_check
      _
    $region175: #{duet_forward.1} parent=1 // pred_check_branch
      %390 = sbr.rel (0) target = $region177
    $region176: #{duet_forward.1} parent=1 // pred_region
      %392 = dma.done [#allocation24], 16
    $region177: #{duet_forward.1} parent=1 // pred_fallthru
      _
    // Predicated region
    $region178: #{duet_forward.1} parent=1 // pred_check
      _
    $region179: #{duet_forward.1} parent=1 // pred_check_branch
      %394 = sbr.rel (0) target = $region181
    $region180: #{duet_forward.1} parent=1 // pred_region
      %396 = dma.done [#allocation24], 512
    $region181: #{duet_forward.1} parent=1 // pred_fallthru
      _
    // Predicated region
    $region182: #{duet_forward.1} parent=1 // pred_check
      _
    $region183: #{duet_forward.1} parent=1 // pred_check_branch
      %398 = sbr.rel (0) target = $region185
    $region184: #{duet_forward.1} parent=1 // pred_region
      %400 = dma.done [#allocation27], 16
    $region185: #{duet_forward.1} parent=1 // pred_fallthru
      _
    // Predicated region
    $region186: #{duet_forward.1} parent=1 // pred_check
      _
    $region187: #{duet_forward.1} parent=1 // pred_check_branch
      %402 = sbr.rel (0) target = $region189
    $region188: #{duet_forward.1} parent=1 // pred_region
      %404 = dma.done [#allocation27], 512
    $region189: #{duet_forward.1} parent=1 // pred_fallthru
      _
    // Predicated region
    $region190: #{duet_forward.1} parent=1 // pred_check
      _
    $region191: #{duet_forward.1} parent=1 // pred_check_branch
      %406 = sbr.rel (0) target = $region193
    $region192: #{duet_forward.1} parent=1 // pred_region
      %408 = dma.done [#allocation30], 16
    $region193: #{duet_forward.1} parent=1 // pred_fallthru
      _
    // Predicated region
    $region194: #{duet_forward.1} parent=1 // pred_check
      _
    $region195: #{duet_forward.1} parent=1 // pred_check_branch
      %410 = sbr.rel (0) target = $region197
    $region196: #{duet_forward.1} parent=1 // pred_region
      %412 = dma.done [#allocation30], 512
    $region197: #{duet_forward.1} parent=1 // pred_fallthru
      _
    // Predicated region
    $region198: #{duet_forward.1} parent=1 // pred_check
      _
    $region199: #{duet_forward.1} parent=1 // pred_check_branch
      %414 = sbr.rel (0) target = $region201
    $region200: #{duet_forward.1} parent=1 // pred_region
      %416 = dma.done [#allocation33], 16
    $region201: #{duet_forward.1} parent=1 // pred_fallthru
      _
    %v417 = vlaneseq
    %v418 = vand.u32 %v417, 127
    %v419 = vld [vmem:[%s3] sm:$0xff]
    %v420 = vld [vmem:[%s3 + $0x8] sm:$0xff]
    %421 = vset.pattern.permute.xlu0 0
    %422 = vperm.xlu0 %421, %v419
    %v423 = vpop.permute.xlu0 %422
    %424 = vset.pattern.permute.xlu0 0
    %425 = vperm.xlu0 %424, %v420
    %v426 = vpop.permute.xlu0 %425
    %vm427 = vcmp.eq.s32.totalorder %v423, %v418
    %vm428 = vcmp.eq.s32.totalorder %v426, %v418
    %v429 = vsel %vm427, 1, 0
    %v430 = vsel %vm428, 1, 0
    %v431 = vcvt.s32.f32 %v429
    %v432 = vcvt.s32.f32 %v430
    %v433 = vld [vmem:[%s11] sm:$0xff]
    %v434 = vld [vmem:[%s11 + $0x8] sm:$0xff]
    %v435 = vld [vmem:[%s11 + $0x10] sm:$0xff]
    %v436 = vld [vmem:[%s11 + $0x18] sm:$0xff]
    %v437 = vld [vmem:[%s11 + $0x20] sm:$0xff]
    %v438 = vld [vmem:[%s11 + $0x28] sm:$0xff]
    %v439 = vld [vmem:[%s11 + $0x30] sm:$0x3]
    %vm440 = vcmask 408576
    %v442 = vsel %vm440, %v431, 0
    %v445 = vsel %vm440, %v432, 0
    %vm447 = vcmask 1041408
    %v449 = vsel %vm447, %v439, 0
    %451 = vmatpush.msra.mxu0 0.0
    %452 = vmatpush.msra.mxu0 0.0
    %453 = vmatpush.msra.mxu0 0.0
    %454 = vmatpush.msra.mxu0 0.0
    %455 = vmatpush.msra.mxu0 0.0
    %456 = vmatpush.msra.mxu0 0.0
    %457 = vmatpush.msra.mxu0 0.0
    %458 = vmatpush.msra.mxu0 0.0
    %459 = vmatpush.msra.mxu0 0.0
    %460 = vmatpush.msra.mxu0 %v449
    %461 = vmatpush.msra.mxu0 %v438
    %462 = vmatpush.msra.mxu0 %v437
    %463 = vmatpush.msra.mxu0 %v436
    %464 = vmatpush.msra.mxu0 %v435
    %465 = vmatpush.msra.mxu0 %v434
    %466 = vmatpush.msra.mxu0 %v433
    %467 = vmatmul.f32.gmra.mxu0 %v442
    %v468 = vpop.f32.mrf.mxu0
    %v469 = vadd.f32 0.0, %v468
    %470 = vmatmul.f32.gmra.mxu0 %v445
    %v471 = vpop.f32.mrf.mxu0
    %v472 = vadd.f32 0.0, %v471
    %473 = vdwg.mxu0
    %v474 = vld [vmem:[%s7] sm:$0xff]
    %v475 = vld [vmem:[%s7 + $0x8] sm:$0xff]
    %477 = vset.pattern.permute.xlu0 0
    %478 = vperm.xlu0 %477, %v474
    %v479 = vpop.permute.xlu0 %478
    %482 = vset.pattern.permute.xlu0 0
    %483 = vperm.xlu0 %482, %v475
    %v484 = vpop.permute.xlu0 %483
    %v486 = vmul.f32 %v469, %v479
    %v487 = vmul.f32 %v472, %v484
    %v488 = vld [vmem:[%s5] sm:$0xff]
    %v489 = vld [vmem:[%s5 + $0x8] sm:$0xff]
    %v490 = vld [vmem:[%s5 + $0x10] sm:$0xff]
    %v491 = vld [vmem:[%s5 + $0x18] sm:$0xff]
    %492 = vset.pattern.permute.xlu0 0
    %493 = vperm.xlu0 %492, %v488
    %v494 = vpop.permute.xlu0 %493
    %495 = vset.pattern.permute.xlu0 0
    %496 = vperm.xlu0 %495, %v489
    %v497 = vpop.permute.xlu0 %496
    %498 = vset.pattern.permute.xlu0 0
    %499 = vperm.xlu0 %498, %v490
    %v500 = vpop.permute.xlu0 %499
    %501 = vset.pattern.permute.xlu0 0
    %502 = vperm.xlu0 %501, %v491
    %v503 = vpop.permute.xlu0 %502
    %vm504 = vcmp.eq.s32.totalorder %v494, %v418
    %vm505 = vcmp.eq.s32.totalorder %v497, %v418
    %vm506 = vcmp.eq.s32.totalorder %v500, %v418
    %vm507 = vcmp.eq.s32.totalorder %v503, %v418
    %v508 = vsel %vm504, 1, 0
    %v509 = vsel %vm505, 1, 0
    %v510 = vsel %vm506, 1, 0
    %v511 = vsel %vm507, 1, 0
    %v512 = vcvt.s32.f32 %v508
    %v513 = vcvt.s32.f32 %v509
    %v514 = vcvt.s32.f32 %v510
    %v515 = vcvt.s32.f32 %v511
    %v517 = vsel %vm440, %v512, 0
    %v520 = vsel %vm440, %v513, 0
    %v523 = vsel %vm440, %v514, 0
    %v526 = vsel %vm440, %v515, 0
    %528 = vmatpush.msra.mxu0 0.0
    %529 = vmatpush.msra.mxu0 0.0
    %530 = vmatpush.msra.mxu0 0.0
    %531 = vmatpush.msra.mxu0 0.0
    %532 = vmatpush.msra.mxu0 0.0
    %533 = vmatpush.msra.mxu0 0.0
    %534 = vmatpush.msra.mxu0 0.0
    %535 = vmatpush.msra.mxu0 0.0
    %536 = vmatpush.msra.mxu0 0.0
    %537 = vmatpush.msra.mxu0 %v449
    %538 = vmatpush.msra.mxu0 %v438
    %539 = vmatpush.msra.mxu0 %v437
    %540 = vmatpush.msra.mxu0 %v436
    %541 = vmatpush.msra.mxu0 %v435
    %542 = vmatpush.msra.mxu0 %v434
    %543 = vmatpush.msra.mxu0 %v433
    %544 = vmatmul.f32.gmra.mxu0 %v517
    %v545 = vpop.f32.mrf.mxu0
    %v546 = vadd.f32 0.0, %v545
    %547 = vmatmul.f32.gmra.mxu0 %v520
    %v548 = vpop.f32.mrf.mxu0
    %v549 = vadd.f32 0.0, %v548
    %550 = vmatmul.f32.gmra.mxu0 %v523
    %v551 = vpop.f32.mrf.mxu0
    %v552 = vadd.f32 0.0, %v551
    %553 = vmatmul.f32.gmra.mxu0 %v526
    %v554 = vpop.f32.mrf.mxu0
    %v555 = vadd.f32 0.0, %v554
    %556 = vdwg.mxu0
    %v557 = vld [vmem:[%s9] sm:$0xff]
    %v558 = vld [vmem:[%s9 + $0x8] sm:$0xff]
    %v559 = vld [vmem:[%s9 + $0x10] sm:$0xff]
    %v560 = vld [vmem:[%s9 + $0x18] sm:$0xff]
    %562 = vset.pattern.permute.xlu0 0
    %563 = vperm.xlu0 %562, %v557
    %v564 = vpop.permute.xlu0 %563
    %567 = vset.pattern.permute.xlu0 0
    %568 = vperm.xlu0 %567, %v558
    %v569 = vpop.permute.xlu0 %568
    %572 = vset.pattern.permute.xlu0 0
    %573 = vperm.xlu0 %572, %v559
    %v574 = vpop.permute.xlu0 %573
    %577 = vset.pattern.permute.xlu0 0
    %578 = vperm.xlu0 %577, %v560
    %v579 = vpop.permute.xlu0 %578
    %v581 = vmul.f32 %v546, %v564
    %v582 = vmul.f32 %v549, %v569
    %v583 = vmul.f32 %v552, %v574
    %v584 = vmul.f32 %v555, %v579
    %v585 = vld [vmem:[%s1] sm:$0xff]
    %v586 = vld [vmem:[%s1 + $0x8] sm:$0xff]
    %v587 = vld [vmem:[#allocation3] sm:$0xff]
    %v588 = vld [vmem:[#allocation3 + $0x8] sm:$0xff]
    %v589 = vld [vmem:[#allocation5] sm:$0x1]
    %v591 = vperm.slane %v589, 0
    %vm593 = vcmask 130048
    %v595 = vsel %vm593, %v585, 0
    %v598 = vsel %vm593, %v586, 0
    %600 = vmatpush.msra.mxu0 0.0
    %601 = vmatpush.msra.mxu0 0.0
    %602 = vmatpush.msra.mxu0 0.0
    %603 = vmatpush.msra.mxu0 0.0
    %604 = vmatpush.msra.mxu0 0.0
    %605 = vmatpush.msra.mxu0 0.0
    %606 = vmatpush.msra.mxu0 0.0
    %607 = vmatpush.msra.mxu0 0.0
    %608 = vmatpush.msra.mxu0 0.0
    %609 = vmatpush.msra.mxu0 0.0
    %610 = vmatpush.msra.mxu0 0.0
    %611 = vmatpush.msra.mxu0 0.0
    %612 = vmatpush.msra.mxu0 0.0
    %613 = vmatpush.msra.mxu0 0.0
    %614 = vmatpush.msra.mxu0 %v588
    %615 = vmatpush.msra.mxu0 %v587
    %616 = vmatmul.f32.gmra.mxu0 %v595
    %v617 = vpop.f32.mrf.mxu0
    %v618 = vadd.f32 %v591, %v617
    %619 = vmatmul.f32.gmra.mxu0 %v598
    %v620 = vpop.f32.mrf.mxu0
    %v621 = vadd.f32 %v591, %v620
    %622 = vdwg.mxu0
    %v623 = vmax.f32 %v618, 0.0
    %v624 = vmax.f32 %v621, 0.0
    %v625 = vld [vmem:[%s17] sm:$0xff]
    %v626 = vld [vmem:[%s17 + $0x8] sm:$0xff]
    %v627 = vld [vmem:[%s17 + $0x10] sm:$0xff]
    %v628 = vld [vmem:[%s17 + $0x18] sm:$0xff]
    %s629 = scalar_lea.vmem %s17, 32
    %v630 = vld [vmem:[%s629] sm:$0xff]
    %v631 = vld [vmem:[%s629 + $0x8] sm:$0xff]
    %v632 = vld [vmem:[%s629 + $0x10] sm:$0xff]
    %v633 = vld [vmem:[%s629 + $0x18] sm:$0xff]
    %v635 = vrot.slane %v623, 2
    %vm636 = vcmask 261120
    %v637 = vsel %vm636, %v635, 0
    %639 = vmatpush.msra.mxu0 0.0
    %640 = vmatpush.msra.mxu0 0.0
    %641 = vmatpush.msra.mxu0 0.0
    %642 = vmatpush.msra.mxu0 0.0
    %643 = vmatpush.msra.mxu0 0.0
    %644 = vmatpush.msra.mxu0 0.0
    %645 = vmatpush.msra.mxu0 0.0
    %646 = vmatpush.msra.mxu0 0.0
    %647 = vmatpush.msra.mxu0 0.0
    %648 = vmatpush.msra.mxu0 0.0
    %649 = vmatpush.msra.mxu0 0.0
    %650 = vmatpush.msra.mxu0 0.0
    %651 = vmatpush.msra.mxu0 %v633
    %652 = vmatpush.msra.mxu0 %v632
    %653 = vmatpush.msra.mxu0 %v631
    %654 = vmatpush.msra.mxu0 %v630
    %655 = vmatmul.f32.gmra.mxu0 %v637
    %v656 = vpop.f32.mrf.mxu0
    %v657 = vadd.f32 0.0, %v656
    %658 = vdwg.mxu0
    %v659 = vsel %vm636, %v623, 0
    %661 = vmatpush.msra.mxu0 0.0
    %662 = vmatpush.msra.mxu0 0.0
    %663 = vmatpush.msra.mxu0 0.0
    %664 = vmatpush.msra.mxu0 0.0
    %665 = vmatpush.msra.mxu0 0.0
    %666 = vmatpush.msra.mxu0 0.0
    %667 = vmatpush.msra.mxu0 0.0
    %668 = vmatpush.msra.mxu0 0.0
    %669 = vmatpush.msra.mxu0 0.0
    %670 = vmatpush.msra.mxu0 0.0
    %671 = vmatpush.msra.mxu0 0.0
    %672 = vmatpush.msra.mxu0 0.0
    %673 = vmatpush.msra.mxu0 %v628
    %674 = vmatpush.msra.mxu0 %v627
    %675 = vmatpush.msra.mxu0 %v626
    %676 = vmatpush.msra.mxu0 %v625
    %677 = vmatmul.f32.gmra.mxu0 %v659
    %v678 = vpop.f32.mrf.mxu0
    %v679 = vadd.f32 %v657, %v678
    %680 = vdwg.mxu0
    %s681 = scalar_lea.vmem %s17, 64
    %v682 = vld [vmem:[%s681] sm:$0xff]
    %v683 = vld [vmem:[%s681 + $0x8] sm:$0xff]
    %v684 = vld [vmem:[%s681 + $0x10] sm:$0xff]
    %v685 = vld [vmem:[%s681 + $0x18] sm:$0xff]
    %v686 = vrot.slane %v623, 4
    %v687 = vsel %vm636, %v686, 0
    %689 = vmatpush.msra.mxu0 0.0
    %690 = vmatpush.msra.mxu0 0.0
    %691 = vmatpush.msra.mxu0 0.0
    %692 = vmatpush.msra.mxu0 0.0
    %693 = vmatpush.msra.mxu0 0.0
    %694 = vmatpush.msra.mxu0 0.0
    %695 = vmatpush.msra.mxu0 0.0
    %696 = vmatpush.msra.mxu0 0.0
    %697 = vmatpush.msra.mxu0 0.0
    %698 = vmatpush.msra.mxu0 0.0
    %699 = vmatpush.msra.mxu0 0.0
    %700 = vmatpush.msra.mxu0 0.0
    %701 = vmatpush.msra.mxu0 %v685
    %702 = vmatpush.msra.mxu0 %v684
    %703 = vmatpush.msra.mxu0 %v683
    %704 = vmatpush.msra.mxu0 %v682
    %705 = vmatmul.f32.gmra.mxu0 %v687
    %v706 = vpop.f32.mrf.mxu0
    %v707 = vadd.f32 0.0, %v706
    %708 = vdwg.mxu0
    %v709 = vadd.f32 %v679, %v707
    %s710 = scalar_lea.vmem %s17, 96
    %v711 = vld [vmem:[%s710] sm:$0xff]
    %v712 = vld [vmem:[%s710 + $0x8] sm:$0xff]
    %v713 = vld [vmem:[%s710 + $0x10] sm:$0xff]
    %v714 = vld [vmem:[%s710 + $0x18] sm:$0xff]
    %v715 = vrot.slane %v623, 6
    %v716 = vsel %vm636, %v715, 0
    %718 = vmatpush.msra.mxu0 0.0
    %719 = vmatpush.msra.mxu0 0.0
    %720 = vmatpush.msra.mxu0 0.0
    %721 = vmatpush.msra.mxu0 0.0
    %722 = vmatpush.msra.mxu0 0.0
    %723 = vmatpush.msra.mxu0 0.0
    %724 = vmatpush.msra.mxu0 0.0
    %725 = vmatpush.msra.mxu0 0.0
    %726 = vmatpush.msra.mxu0 0.0
    %727 = vmatpush.msra.mxu0 0.0
    %728 = vmatpush.msra.mxu0 0.0
    %729 = vmatpush.msra.mxu0 0.0
    %730 = vmatpush.msra.mxu0 %v714
    %731 = vmatpush.msra.mxu0 %v713
    %732 = vmatpush.msra.mxu0 %v712
    %733 = vmatpush.msra.mxu0 %v711
    %734 = vmatmul.f32.gmra.mxu0 %v716
    %v735 = vpop.f32.mrf.mxu0
    %v736 = vadd.f32 0.0, %v735
    %737 = vdwg.mxu0
    %v738 = vadd.f32 %v709, %v736
    %s739 = scalar_lea.vmem %s17, 128
    %v740 = vld [vmem:[%s739] sm:$0xff]
    %v741 = vld [vmem:[%s739 + $0x8] sm:$0xff]
    %v742 = vld [vmem:[%s739 + $0x10] sm:$0xff]
    %v743 = vld [vmem:[%s739 + $0x18] sm:$0xff]
    %v745 = vsel %vm636, %v624, 0
    %747 = vmatpush.msra.mxu0 0.0
    %748 = vmatpush.msra.mxu0 0.0
    %749 = vmatpush.msra.mxu0 0.0
    %750 = vmatpush.msra.mxu0 0.0
    %751 = vmatpush.msra.mxu0 0.0
    %752 = vmatpush.msra.mxu0 0.0
    %753 = vmatpush.msra.mxu0 0.0
    %754 = vmatpush.msra.mxu0 0.0
    %755 = vmatpush.msra.mxu0 0.0
    %756 = vmatpush.msra.mxu0 0.0
    %757 = vmatpush.msra.mxu0 0.0
    %758 = vmatpush.msra.mxu0 0.0
    %759 = vmatpush.msra.mxu0 %v743
    %760 = vmatpush.msra.mxu0 %v742
    %761 = vmatpush.msra.mxu0 %v741
    %762 = vmatpush.msra.mxu0 %v740
    %763 = vmatmul.f32.gmra.mxu0 %v745
    %v764 = vpop.f32.mrf.mxu0
    %v765 = vadd.f32 0.0, %v764
    %766 = vdwg.mxu0
    %v767 = vadd.f32 %v738, %v765
    %s768 = scalar_lea.vmem %s17, 160
    %v769 = vld [vmem:[%s768] sm:$0xff]
    %v770 = vld [vmem:[%s768 + $0x8] sm:$0xff]
    %v771 = vld [vmem:[%s768 + $0x10] sm:$0xff]
    %v772 = vld [vmem:[%s768 + $0x18] sm:$0xff]
    %v773 = vrot.slane %v624, 2
    %v774 = vsel %vm636, %v773, 0
    %776 = vmatpush.msra.mxu0 0.0
    %777 = vmatpush.msra.mxu0 0.0
    %778 = vmatpush.msra.mxu0 0.0
    %779 = vmatpush.msra.mxu0 0.0
    %780 = vmatpush.msra.mxu0 0.0
    %781 = vmatpush.msra.mxu0 0.0
    %782 = vmatpush.msra.mxu0 0.0
    %783 = vmatpush.msra.mxu0 0.0
    %784 = vmatpush.msra.mxu0 0.0
    %785 = vmatpush.msra.mxu0 0.0
    %786 = vmatpush.msra.mxu0 0.0
    %787 = vmatpush.msra.mxu0 0.0
    %788 = vmatpush.msra.mxu0 %v772
    %789 = vmatpush.msra.mxu0 %v771
    %790 = vmatpush.msra.mxu0 %v770
    %791 = vmatpush.msra.mxu0 %v769
    %792 = vmatmul.f32.gmra.mxu0 %v774
    %v793 = vpop.f32.mrf.mxu0
    %v794 = vadd.f32 0.0, %v793
    %795 = vdwg.mxu0
    %v796 = vadd.f32 %v767, %v794
    %s797 = scalar_lea.vmem %s17, 192
    %v798 = vld [vmem:[%s797] sm:$0xff]
    %v799 = vld [vmem:[%s797 + $0x8] sm:$0xff]
    %v800 = vld [vmem:[%s797 + $0x10] sm:$0xff]
    %v801 = vld [vmem:[%s797 + $0x18] sm:$0xff]
    %v802 = vrot.slane %v624, 4
    %v803 = vsel %vm636, %v802, 0
    %805 = vmatpush.msra.mxu0 0.0
    %806 = vmatpush.msra.mxu0 0.0
    %807 = vmatpush.msra.mxu0 0.0
    %808 = vmatpush.msra.mxu0 0.0
    %809 = vmatpush.msra.mxu0 0.0
    %810 = vmatpush.msra.mxu0 0.0
    %811 = vmatpush.msra.mxu0 0.0
    %812 = vmatpush.msra.mxu0 0.0
    %813 = vmatpush.msra.mxu0 0.0
    %814 = vmatpush.msra.mxu0 0.0
    %815 = vmatpush.msra.mxu0 0.0
    %816 = vmatpush.msra.mxu0 0.0
    %817 = vmatpush.msra.mxu0 %v801
    %818 = vmatpush.msra.mxu0 %v800
    %819 = vmatpush.msra.mxu0 %v799
    %820 = vmatpush.msra.mxu0 %v798
    %821 = vmatmul.f32.gmra.mxu0 %v803
    %v822 = vpop.f32.mrf.mxu0
    %v823 = vadd.f32 0.0, %v822
    %824 = vdwg.mxu0
    %v825 = vadd.f32 %v796, %v823
    %s826 = scalar_lea.vmem %s17, 224
    %v827 = vld [vmem:[%s826] sm:$0xff]
    %v828 = vld [vmem:[%s826 + $0x8] sm:$0xff]
    %v829 = vld [vmem:[%s826 + $0x10] sm:$0xff]
    %v830 = vld [vmem:[%s826 + $0x18] sm:$0xff]
    %v831 = vrot.slane %v624, 6
    %v832 = vsel %vm636, %v831, 0
    %834 = vmatpush.msra.mxu0 0.0
    %835 = vmatpush.msra.mxu0 0.0
    %836 = vmatpush.msra.mxu0 0.0
    %837 = vmatpush.msra.mxu0 0.0
    %838 = vmatpush.msra.mxu0 0.0
    %839 = vmatpush.msra.mxu0 0.0
    %840 = vmatpush.msra.mxu0 0.0
    %841 = vmatpush.msra.mxu0 0.0
    %842 = vmatpush.msra.mxu0 0.0
    %843 = vmatpush.msra.mxu0 0.0
    %844 = vmatpush.msra.mxu0 0.0
    %845 = vmatpush.msra.mxu0 0.0
    %846 = vmatpush.msra.mxu0 %v830
    %847 = vmatpush.msra.mxu0 %v829
    %848 = vmatpush.msra.mxu0 %v828
    %849 = vmatpush.msra.mxu0 %v827
    %850 = vmatmul.f32.gmra.mxu0 %v832
    %v851 = vpop.f32.mrf.mxu0
    %v852 = vadd.f32 0.0, %v851
    %853 = vdwg.mxu0
    %v854 = vadd.f32 %v825, %v852
    %v855 = vld [vmem:[#allocation7] sm:$0x1]
    %v857 = vperm.slane %v855, 0
    %v859 = vadd.f32 %v854, %v857
    %v860 = vmax.f32 %v859, 0.0
    %v861 = vld [vmem:[%s21] sm:$0xff]
    %v862 = vld [vmem:[%s21 + $0x8] sm:$0xff]
    %v863 = vld [vmem:[%s21 + $0x10] sm:$0xff]
    %v864 = vld [vmem:[%s21 + $0x18] sm:$0xff]
    %v865 = vld [vmem:[#allocation8] sm:$0x1]
    %v867 = vperm.slane %v865, 0
    %v870 = vsel %vm636, %v860, 0
    %872 = vmatpush.msra.mxu0 0.0
    %873 = vmatpush.msra.mxu0 0.0
    %874 = vmatpush.msra.mxu0 0.0
    %875 = vmatpush.msra.mxu0 0.0
    %876 = vmatpush.msra.mxu0 0.0
    %877 = vmatpush.msra.mxu0 0.0
    %878 = vmatpush.msra.mxu0 0.0
    %879 = vmatpush.msra.mxu0 0.0
    %880 = vmatpush.msra.mxu0 0.0
    %881 = vmatpush.msra.mxu0 0.0
    %882 = vmatpush.msra.mxu0 0.0
    %883 = vmatpush.msra.mxu0 0.0
    %884 = vmatpush.msra.mxu0 %v864
    %885 = vmatpush.msra.mxu0 %v863
    %886 = vmatpush.msra.mxu0 %v862
    %887 = vmatpush.msra.mxu0 %v861
    %888 = vmatmul.f32.gmra.mxu0 %v870
    %v889 = vpop.f32.mrf.mxu0
    %v890 = vadd.f32 %v867, %v889
    %891 = vdwg.mxu0
    %v892 = vmax.f32 %v890, 0.0
    %v893 = vld [vmem:[#allocation10] sm:$0xff]
    %v894 = vld [vmem:[#allocation10 + $0x8] sm:$0xff]
    %v895 = vld [vmem:[#allocation10 + $0x10] sm:$0xff]
    %v896 = vld [vmem:[#allocation10 + $0x18] sm:$0xff]
    %v898 = vsel %vm636, %v486, 0
    %v901 = vsel %vm636, %v487, 0
    %903 = vmatpush.msra.mxu0 0.0
    %904 = vmatpush.msra.mxu0 0.0
    %905 = vmatpush.msra.mxu0 0.0
    %906 = vmatpush.msra.mxu0 0.0
    %907 = vmatpush.msra.mxu0 0.0
    %908 = vmatpush.msra.mxu0 0.0
    %909 = vmatpush.msra.mxu0 0.0
    %910 = vmatpush.msra.mxu0 0.0
    %911 = vmatpush.msra.mxu0 0.0
    %912 = vmatpush.msra.mxu0 0.0
    %913 = vmatpush.msra.mxu0 0.0
    %914 = vmatpush.msra.mxu0 0.0
    %915 = vmatpush.msra.mxu0 %v896
    %916 = vmatpush.msra.mxu0 %v895
    %917 = vmatpush.msra.mxu0 %v894
    %918 = vmatpush.msra.mxu0 %v893
    %919 = vmatmul.f32.gmra.mxu0 %v898
    %v920 = vpop.f32.mrf.mxu0
    %v921 = vadd.f32 0.0, %v920
    %922 = vmatmul.f32.gmra.mxu0 %v901
    %v923 = vpop.f32.mrf.mxu0
    %v924 = vadd.f32 0.0, %v923
    %925 = vdwg.mxu0
    %s926 = scalar_lea.vmem [#allocation10], 32
    %v927 = vld [vmem:[%s926] sm:$0xff]
    %v928 = vld [vmem:[%s926 + $0x8] sm:$0xff]
    %v929 = vld [vmem:[%s926 + $0x10] sm:$0xff]
    %v930 = vld [vmem:[%s926 + $0x18] sm:$0xff]
    %931 = vmatpush.msra.mxu0 0.0
    %932 = vmatpush.msra.mxu0 0.0
    %933 = vmatpush.msra.mxu0 0.0
    %934 = vmatpush.msra.mxu0 0.0
    %935 = vmatpush.msra.mxu0 0.0
    %936 = vmatpush.msra.mxu0 0.0
    %937 = vmatpush.msra.mxu0 0.0
    %938 = vmatpush.msra.mxu0 0.0
    %939 = vmatpush.msra.mxu0 0.0
    %940 = vmatpush.msra.mxu0 0.0
    %941 = vmatpush.msra.mxu0 0.0
    %942 = vmatpush.msra.mxu0 0.0
    %943 = vmatpush.msra.mxu0 %v930
    %944 = vmatpush.msra.mxu0 %v929
    %945 = vmatpush.msra.mxu0 %v928
    %946 = vmatpush.msra.mxu0 %v927
    %947 = vmatmul.f32.gmra.mxu0 %v898
    %v948 = vpop.f32.mrf.mxu0
    %v949 = vadd.f32 0.0, %v948
    %950 = vmatmul.f32.gmra.mxu0 %v901
    %v951 = vpop.f32.mrf.mxu0
    %v952 = vadd.f32 0.0, %v951
    %953 = vdwg.mxu0
    %s954 = scalar_lea.vmem [#allocation10], 64
    %v955 = vld [vmem:[%s954] sm:$0xff]
    %v956 = vld [vmem:[%s954 + $0x8] sm:$0xff]
    %v957 = vld [vmem:[%s954 + $0x10] sm:$0xff]
    %v958 = vld [vmem:[%s954 + $0x18] sm:$0xff]
    %959 = vmatpush.msra.mxu0 0.0
    %960 = vmatpush.msra.mxu0 0.0
    %961 = vmatpush.msra.mxu0 0.0
    %962 = vmatpush.msra.mxu0 0.0
    %963 = vmatpush.msra.mxu0 0.0
    %964 = vmatpush.msra.mxu0 0.0
    %965 = vmatpush.msra.mxu0 0.0
    %966 = vmatpush.msra.mxu0 0.0
    %967 = vmatpush.msra.mxu0 0.0
    %968 = vmatpush.msra.mxu0 0.0
    %969 = vmatpush.msra.mxu0 0.0
    %970 = vmatpush.msra.mxu0 0.0
    %971 = vmatpush.msra.mxu0 %v958
    %972 = vmatpush.msra.mxu0 %v957
    %973 = vmatpush.msra.mxu0 %v956
    %974 = vmatpush.msra.mxu0 %v955
    %975 = vmatmul.f32.gmra.mxu0 %v898
    %v976 = vpop.f32.mrf.mxu0
    %v977 = vadd.f32 0.0, %v976
    %978 = vmatmul.f32.gmra.mxu0 %v901
    %v979 = vpop.f32.mrf.mxu0
    %v980 = vadd.f32 0.0, %v979
    %981 = vdwg.mxu0
    %v982 = vld [vmem:[#allocation16] sm:$0xff]
    %v983 = vld [vmem:[#allocation16 + $0x8] sm:$0xff]
    %v984 = vld [vmem:[#allocation16 + $0x10] sm:$0xff]
    %v985 = vld [vmem:[#allocation16 + $0x18] sm:$0xff]
    %v987 = vsel %vm636, %v581, 0
    %v990 = vsel %vm636, %v582, 0
    %v993 = vsel %vm636, %v583, 0
    %v996 = vsel %vm636, %v584, 0
    %998 = vmatpush.msra.mxu0 0.0
    %999 = vmatpush.msra.mxu0 0.0
    %1000 = vmatpush.msra.mxu0 0.0
    %1001 = vmatpush.msra.mxu0 0.0
    %1002 = vmatpush.msra.mxu0 0.0
    %1003 = vmatpush.msra.mxu0 0.0
    %1004 = vmatpush.msra.mxu0 0.0
    %1005 = vmatpush.msra.mxu0 0.0
    %1006 = vmatpush.msra.mxu0 0.0
    %1007 = vmatpush.msra.mxu0 0.0
    %1008 = vmatpush.msra.mxu0 0.0
    %1009 = vmatpush.msra.mxu0 0.0
    %1010 = vmatpush.msra.mxu0 %v985
    %1011 = vmatpush.msra.mxu0 %v984
    %1012 = vmatpush.msra.mxu0 %v983
    %1013 = vmatpush.msra.mxu0 %v982
    %1014 = vmatmul.f32.gmra.mxu0 %v987
    %v1015 = vpop.f32.mrf.mxu0
    %v1016 = vadd.f32 0.0, %v1015
    %1017 = vmatmul.f32.gmra.mxu0 %v990
    %v1018 = vpop.f32.mrf.mxu0
    %v1019 = vadd.f32 0.0, %v1018
    %1020 = vmatmul.f32.gmra.mxu0 %v993
    %v1021 = vpop.f32.mrf.mxu0
    %v1022 = vadd.f32 0.0, %v1021
    %1023 = vmatmul.f32.gmra.mxu0 %v996
    %v1024 = vpop.f32.mrf.mxu0
    %v1025 = vadd.f32 0.0, %v1024
    %1026 = vdwg.mxu0
    %s1027 = scalar_lea.vmem [#allocation16], 32
    %v1028 = vld [vmem:[%s1027] sm:$0xff]
    %v1029 = vld [vmem:[%s1027 + $0x8] sm:$0xff]
    %v1030 = vld [vmem:[%s1027 + $0x10] sm:$0xff]
    %v1031 = vld [vmem:[%s1027 + $0x18] sm:$0xff]
    %1032 = vmatpush.msra.mxu0 0.0
    %1033 = vmatpush.msra.mxu0 0.0
    %1034 = vmatpush.msra.mxu0 0.0
    %1035 = vmatpush.msra.mxu0 0.0
    %1036 = vmatpush.msra.mxu0 0.0
    %1037 = vmatpush.msra.mxu0 0.0
    %1038 = vmatpush.msra.mxu0 0.0
    %1039 = vmatpush.msra.mxu0 0.0
    %1040 = vmatpush.msra.mxu0 0.0
    %1041 = vmatpush.msra.mxu0 0.0
    %1042 = vmatpush.msra.mxu0 0.0
    %1043 = vmatpush.msra.mxu0 0.0
    %1044 = vmatpush.msra.mxu0 %v1031
    %1045 = vmatpush.msra.mxu0 %v1030
    %1046 = vmatpush.msra.mxu0 %v1029
    %1047 = vmatpush.msra.mxu0 %v1028
    %1048 = vmatmul.f32.gmra.mxu0 %v987
    %v1049 = vpop.f32.mrf.mxu0
    %v1050 = vadd.f32 0.0, %v1049
    %1051 = vmatmul.f32.gmra.mxu0 %v990
    %v1052 = vpop.f32.mrf.mxu0
    %v1053 = vadd.f32 0.0, %v1052
    %1054 = vmatmul.f32.gmra.mxu0 %v993
    %v1055 = vpop.f32.mrf.mxu0
    %v1056 = vadd.f32 0.0, %v1055
    %1057 = vmatmul.f32.gmra.mxu0 %v996
    %v1058 = vpop.f32.mrf.mxu0
    %v1059 = vadd.f32 0.0, %v1058
    %1060 = vdwg.mxu0
    %s1061 = scalar_lea.vmem [#allocation16], 64
    %v1062 = vld [vmem:[%s1061] sm:$0xff]
    %v1063 = vld [vmem:[%s1061 + $0x8] sm:$0xff]
    %v1064 = vld [vmem:[%s1061 + $0x10] sm:$0xff]
    %v1065 = vld [vmem:[%s1061 + $0x18] sm:$0xff]
    %1066 = vmatpush.msra.mxu0 0.0
    %1067 = vmatpush.msra.mxu0 0.0
    %1068 = vmatpush.msra.mxu0 0.0
    %1069 = vmatpush.msra.mxu0 0.0
    %1070 = vmatpush.msra.mxu0 0.0
    %1071 = vmatpush.msra.mxu0 0.0
    %1072 = vmatpush.msra.mxu0 0.0
    %1073 = vmatpush.msra.mxu0 0.0
    %1074 = vmatpush.msra.mxu0 0.0
    %1075 = vmatpush.msra.mxu0 0.0
    %1076 = vmatpush.msra.mxu0 0.0
    %1077 = vmatpush.msra.mxu0 0.0
    %1078 = vmatpush.msra.mxu0 %v1065
    %1079 = vmatpush.msra.mxu0 %v1064
    %1080 = vmatpush.msra.mxu0 %v1063
    %1081 = vmatpush.msra.mxu0 %v1062
    %1082 = vmatmul.f32.gmra.mxu0 %v987
    %v1083 = vpop.f32.mrf.mxu0
    %v1084 = vadd.f32 0.0, %v1083
    %1085 = vmatmul.f32.gmra.mxu0 %v990
    %v1086 = vpop.f32.mrf.mxu0
    %v1087 = vadd.f32 0.0, %v1086
    %1088 = vmatmul.f32.gmra.mxu0 %v993
    %v1089 = vpop.f32.mrf.mxu0
    %v1090 = vadd.f32 0.0, %v1089
    %1091 = vmatmul.f32.gmra.mxu0 %v996
    %v1092 = vpop.f32.mrf.mxu0
    %v1093 = vadd.f32 0.0, %v1092
    %1094 = vdwg.mxu0
    %v1096 = vrot.slane %v949, 1
    %v1098 = vadd.f32 %v921, %v1096
    %v1100 = vrot.slane %v977, 2
    %v1102 = vadd.f32 %v1098, %v1100
    %v1103 = vld [vmem:[#allocation11] sm:$0x1]
    %v1105 = vperm.slane %v1103, 0
    %v1107 = vadd.f32 %v1102, %v1105
    %v1108 = vmax.f32 %v1107, 0.0
    %vm1109 = vcmask 259072
    %v1110 = vsel %vm1109, %v1108, -inf
    %v1111 = vrot.slane %v1110, 4
    %v1112 = vmax.f32 %v1110, %v1111
    %v1113 = vrot.slane %v1112, 2
    %v1114 = vmax.f32 %v1112, %v1113
    %v1115 = vrot.slane %v1114, 1
    %v1116 = vmax.f32 %v1114, %v1115
    %v1117 = vld [vmem:[#allocation13] sm:$0xff]
    %v1118 = vld [vmem:[#allocation13 + $0x8] sm:$0xff]
    %v1119 = vld [vmem:[#allocation13 + $0x10] sm:$0xff]
    %v1120 = vld [vmem:[#allocation13 + $0x18] sm:$0xff]
    %v1121 = vld [vmem:[#allocation14] sm:$0x1]
    %v1123 = vsel %vm636, %v1116, 0
    %1125 = vmatpush.msra.mxu0 0.0
    %1126 = vmatpush.msra.mxu0 0.0
    %1127 = vmatpush.msra.mxu0 0.0
    %1128 = vmatpush.msra.mxu0 0.0
    %1129 = vmatpush.msra.mxu0 0.0
    %1130 = vmatpush.msra.mxu0 0.0
    %1131 = vmatpush.msra.mxu0 0.0
    %1132 = vmatpush.msra.mxu0 0.0
    %1133 = vmatpush.msra.mxu0 0.0
    %1134 = vmatpush.msra.mxu0 0.0
    %1135 = vmatpush.msra.mxu0 0.0
    %1136 = vmatpush.msra.mxu0 0.0
    %1137 = vmatpush.msra.mxu0 %v1120
    %1138 = vmatpush.msra.mxu0 %v1119
    %1139 = vmatpush.msra.mxu0 %v1118
    %1140 = vmatpush.msra.mxu0 %v1117
    %1141 = vmatmul.f32.gmra.mxu0 %v1123
    %v1142 = vpop.f32.mrf.mxu0
    %v1143 = vadd.f32 %v1121, %v1142
    %1144 = vdwg.mxu0
    %v1145 = vmax.f32 %v1143, 0.0
    %vm1148 = vcmask 1046528
    %v1149 = vrot.slane %v1050, 1
    %v1150 = vrot.slane %v1053, 1
    %v1151 = vsel %vm1148, %v1149, %v1150
    %v1154 = vadd.f32 %v1016, %v1151
    %v1155 = vadd.f32 %v1019, %v1150
    %vm1158 = vcmask 1045504
    %v1159 = vrot.slane %v1084, 2
    %v1160 = vrot.slane %v1087, 2
    %v1161 = vsel %vm1158, %v1159, %v1160
    %v1164 = vadd.f32 %v1154, %v1161
    %v1165 = vadd.f32 %v1155, %v1160
    %v1166 = vld [vmem:[#allocation17] sm:$0x1]
    %v1168 = vperm.slane %v1166, 0
    %v1170 = vadd.f32 %v1164, %v1168
    %v1171 = vadd.f32 %v1165, %v1168
    %v1172 = vmax.f32 %v1170, 0.0
    %v1173 = vmax.f32 %v1171, 0.0
    %v1176 = vrot.slane %v1172, 1
    %v1177 = vrot.slane %v1173, 1
    %v1178 = vsel %vm1148, %v1176, %v1177
    %v1181 = vmax.f32 %v1172, %v1178
    %v1182 = vmax.f32 %v1173, %v1177
    %v1185 = vrot.slane %v1181, 2
    %v1186 = vrot.slane %v1182, 2
    %v1187 = vsel %vm1158, %v1185, %v1186
    %v1190 = vmax.f32 %v1181, %v1187
    %v1191 = vmax.f32 %v1182, %v1186
    %vm1194 = vcmask 1043456
    %v1195 = vrot.slane %v1190, 4
    %v1196 = vrot.slane %v1191, 4
    %v1197 = vsel %vm1194, %v1195, %v1196
    %v1199 = vmax.f32 %v1190, %v1197
    %v1200 = vld [vmem:[#allocation19] sm:$0xff]
    %v1201 = vld [vmem:[#allocation19 + $0x8] sm:$0xff]
    %v1202 = vld [vmem:[#allocation19 + $0x10] sm:$0xff]
    %v1203 = vld [vmem:[#allocation19 + $0x18] sm:$0xff]
    %v1204 = vld [vmem:[#allocation20] sm:$0x1]
    %v1206 = vperm.slane %v1204, 0
    %v1209 = vsel %vm636, %v1199, 0
    %1211 = vmatpush.msra.mxu0 0.0
    %1212 = vmatpush.msra.mxu0 0.0
    %1213 = vmatpush.msra.mxu0 0.0
    %1214 = vmatpush.msra.mxu0 0.0
    %1215 = vmatpush.msra.mxu0 0.0
    %1216 = vmatpush.msra.mxu0 0.0
    %1217 = vmatpush.msra.mxu0 0.0
    %1218 = vmatpush.msra.mxu0 0.0
    %1219 = vmatpush.msra.mxu0 0.0
    %1220 = vmatpush.msra.mxu0 0.0
    %1221 = vmatpush.msra.mxu0 0.0
    %1222 = vmatpush.msra.mxu0 0.0
    %1223 = vmatpush.msra.mxu0 %v1203
    %1224 = vmatpush.msra.mxu0 %v1202
    %1225 = vmatpush.msra.mxu0 %v1201
    %1226 = vmatpush.msra.mxu0 %v1200
    %1227 = vmatmul.f32.gmra.mxu0 %v1209
    %v1228 = vpop.f32.mrf.mxu0
    %v1229 = vadd.f32 %v1206, %v1228
    %1230 = vdwg.mxu0
    %v1231 = vmax.f32 %v1229, 0.0
    %v1232 = vperm.slane %v1145, 0
    %v1233 = vmul.f32 %v1231, %v1232
    %v1234 = vld [vmem:[#allocation22] sm:$0xff]
    %v1235 = vld [vmem:[#allocation22 + $0x8] sm:$0xff]
    %v1236 = vld [vmem:[#allocation22 + $0x10] sm:$0xff]
    %v1237 = vld [vmem:[#allocation22 + $0x18] sm:$0xff]
    %s1238 = scalar_lea.vmem [#allocation22], 32
    %v1239 = vld [vmem:[%s1238] sm:$0xff]
    %v1240 = vld [vmem:[%s1238 + $0x8] sm:$0xff]
    %v1241 = vld [vmem:[%s1238 + $0x10] sm:$0xff]
    %v1242 = vld [vmem:[%s1238 + $0x18] sm:$0xff]
    %v1244 = vrot.slane %v1233, 1
    %v1245 = vsel %vm636, %v1244, 0
    %1247 = vmatpush.msra.mxu0 0.0
    %1248 = vmatpush.msra.mxu0 0.0
    %1249 = vmatpush.msra.mxu0 0.0
    %1250 = vmatpush.msra.mxu0 0.0
    %1251 = vmatpush.msra.mxu0 0.0
    %1252 = vmatpush.msra.mxu0 0.0
    %1253 = vmatpush.msra.mxu0 0.0
    %1254 = vmatpush.msra.mxu0 0.0
    %1255 = vmatpush.msra.mxu0 0.0
    %1256 = vmatpush.msra.mxu0 0.0
    %1257 = vmatpush.msra.mxu0 0.0
    %1258 = vmatpush.msra.mxu0 0.0
    %1259 = vmatpush.msra.mxu0 %v1242
    %1260 = vmatpush.msra.mxu0 %v1241
    %1261 = vmatpush.msra.mxu0 %v1240
    %1262 = vmatpush.msra.mxu0 %v1239
    %1263 = vmatmul.f32.gmra.mxu0 %v1245
    %v1264 = vpop.f32.mrf.mxu0
    %v1265 = vadd.f32 0.0, %v1264
    %1266 = vdwg.mxu0
    %v1267 = vsel %vm636, %v1233, 0
    %1269 = vmatpush.msra.mxu0 0.0
    %1270 = vmatpush.msra.mxu0 0.0
    %1271 = vmatpush.msra.mxu0 0.0
    %1272 = vmatpush.msra.mxu0 0.0
    %1273 = vmatpush.msra.mxu0 0.0
    %1274 = vmatpush.msra.mxu0 0.0
    %1275 = vmatpush.msra.mxu0 0.0
    %1276 = vmatpush.msra.mxu0 0.0
    %1277 = vmatpush.msra.mxu0 0.0
    %1278 = vmatpush.msra.mxu0 0.0
    %1279 = vmatpush.msra.mxu0 0.0
    %1280 = vmatpush.msra.mxu0 0.0
    %1281 = vmatpush.msra.mxu0 %v1237
    %1282 = vmatpush.msra.mxu0 %v1236
    %1283 = vmatpush.msra.mxu0 %v1235
    %1284 = vmatpush.msra.mxu0 %v1234
    %1285 = vmatmul.f32.gmra.mxu0 %v1267
    %v1286 = vpop.f32.mrf.mxu0
    %v1287 = vadd.f32 %v1265, %v1286
    %1288 = vdwg.mxu0
    %s1289 = scalar_lea.vmem [#allocation22], 64
    %v1290 = vld [vmem:[%s1289] sm:$0xff]
    %v1291 = vld [vmem:[%s1289 + $0x8] sm:$0xff]
    %v1292 = vld [vmem:[%s1289 + $0x10] sm:$0xff]
    %v1293 = vld [vmem:[%s1289 + $0x18] sm:$0xff]
    %v1294 = vrot.slane %v1233, 2
    %v1295 = vsel %vm636, %v1294, 0
    %1297 = vmatpush.msra.mxu0 0.0
    %1298 = vmatpush.msra.mxu0 0.0
    %1299 = vmatpush.msra.mxu0 0.0
    %1300 = vmatpush.msra.mxu0 0.0
    %1301 = vmatpush.msra.mxu0 0.0
    %1302 = vmatpush.msra.mxu0 0.0
    %1303 = vmatpush.msra.mxu0 0.0
    %1304 = vmatpush.msra.mxu0 0.0
    %1305 = vmatpush.msra.mxu0 0.0
    %1306 = vmatpush.msra.mxu0 0.0
    %1307 = vmatpush.msra.mxu0 0.0
    %1308 = vmatpush.msra.mxu0 0.0
    %1309 = vmatpush.msra.mxu0 %v1293
    %1310 = vmatpush.msra.mxu0 %v1292
    %1311 = vmatpush.msra.mxu0 %v1291
    %1312 = vmatpush.msra.mxu0 %v1290
    %1313 = vmatmul.f32.gmra.mxu0 %v1295
    %v1314 = vpop.f32.mrf.mxu0
    %v1315 = vadd.f32 0.0, %v1314
    %1316 = vdwg.mxu0
    %v1317 = vadd.f32 %v1287, %v1315
    %s1318 = scalar_lea.vmem [#allocation22], 96
    %v1319 = vld [vmem:[%s1318] sm:$0xff]
    %v1320 = vld [vmem:[%s1318 + $0x8] sm:$0xff]
    %v1321 = vld [vmem:[%s1318 + $0x10] sm:$0xff]
    %v1322 = vld [vmem:[%s1318 + $0x18] sm:$0xff]
    %v1323 = vrot.slane %v1233, 3
    %v1324 = vsel %vm636, %v1323, 0
    %1326 = vmatpush.msra.mxu0 0.0
    %1327 = vmatpush.msra.mxu0 0.0
    %1328 = vmatpush.msra.mxu0 0.0
    %1329 = vmatpush.msra.mxu0 0.0
    %1330 = vmatpush.msra.mxu0 0.0
    %1331 = vmatpush.msra.mxu0 0.0
    %1332 = vmatpush.msra.mxu0 0.0
    %1333 = vmatpush.msra.mxu0 0.0
    %1334 = vmatpush.msra.mxu0 0.0
    %1335 = vmatpush.msra.mxu0 0.0
    %1336 = vmatpush.msra.mxu0 0.0
    %1337 = vmatpush.msra.mxu0 0.0
    %1338 = vmatpush.msra.mxu0 %v1322
    %1339 = vmatpush.msra.mxu0 %v1321
    %1340 = vmatpush.msra.mxu0 %v1320
    %1341 = vmatpush.msra.mxu0 %v1319
    %1342 = vmatmul.f32.gmra.mxu0 %v1324
    %v1343 = vpop.f32.mrf.mxu0
    %v1344 = vadd.f32 0.0, %v1343
    %1345 = vdwg.mxu0
    %v1346 = vadd.f32 %v1317, %v1344
    %s1347 = scalar_lea.vmem [#allocation22], 128
    %v1348 = vld [vmem:[%s1347] sm:$0xff]
    %v1349 = vld [vmem:[%s1347 + $0x8] sm:$0xff]
    %v1350 = vld [vmem:[%s1347 + $0x10] sm:$0xff]
    %v1351 = vld [vmem:[%s1347 + $0x18] sm:$0xff]
    %v1352 = vrot.slane %v1233, 4
    %v1353 = vsel %vm636, %v1352, 0
    %1355 = vmatpush.msra.mxu0 0.0
    %1356 = vmatpush.msra.mxu0 0.0
    %1357 = vmatpush.msra.mxu0 0.0
    %1358 = vmatpush.msra.mxu0 0.0
    %1359 = vmatpush.msra.mxu0 0.0
    %1360 = vmatpush.msra.mxu0 0.0
    %1361 = vmatpush.msra.mxu0 0.0
    %1362 = vmatpush.msra.mxu0 0.0
    %1363 = vmatpush.msra.mxu0 0.0
    %1364 = vmatpush.msra.mxu0 0.0
    %1365 = vmatpush.msra.mxu0 0.0
    %1366 = vmatpush.msra.mxu0 0.0
    %1367 = vmatpush.msra.mxu0 %v1351
    %1368 = vmatpush.msra.mxu0 %v1350
    %1369 = vmatpush.msra.mxu0 %v1349
    %1370 = vmatpush.msra.mxu0 %v1348
    %1371 = vmatmul.f32.gmra.mxu0 %v1353
    %v1372 = vpop.f32.mrf.mxu0
    %v1373 = vadd.f32 0.0, %v1372
    %1374 = vdwg.mxu0
    %v1375 = vadd.f32 %v1346, %v1373
    %s1376 = scalar_lea.vmem [#allocation22], 160
    %v1377 = vld [vmem:[%s1376] sm:$0xff]
    %v1378 = vld [vmem:[%s1376 + $0x8] sm:$0xff]
    %v1379 = vld [vmem:[%s1376 + $0x10] sm:$0xff]
    %v1380 = vld [vmem:[%s1376 + $0x18] sm:$0xff]
    %v1381 = vrot.slane %v1233, 5
    %v1382 = vsel %vm636, %v1381, 0
    %1384 = vmatpush.msra.mxu0 0.0
    %1385 = vmatpush.msra.mxu0 0.0
    %1386 = vmatpush.msra.mxu0 0.0
    %1387 = vmatpush.msra.mxu0 0.0
    %1388 = vmatpush.msra.mxu0 0.0
    %1389 = vmatpush.msra.mxu0 0.0
    %1390 = vmatpush.msra.mxu0 0.0
    %1391 = vmatpush.msra.mxu0 0.0
    %1392 = vmatpush.msra.mxu0 0.0
    %1393 = vmatpush.msra.mxu0 0.0
    %1394 = vmatpush.msra.mxu0 0.0
    %1395 = vmatpush.msra.mxu0 0.0
    %1396 = vmatpush.msra.mxu0 %v1380
    %1397 = vmatpush.msra.mxu0 %v1379
    %1398 = vmatpush.msra.mxu0 %v1378
    %1399 = vmatpush.msra.mxu0 %v1377
    %1400 = vmatmul.f32.gmra.mxu0 %v1382
    %v1401 = vpop.f32.mrf.mxu0
    %v1402 = vadd.f32 0.0, %v1401
    %1403 = vdwg.mxu0
    %v1404 = vadd.f32 %v1375, %v1402
    %s1405 = scalar_lea.vmem [#allocation22], 192
    %v1406 = vld [vmem:[%s1405] sm:$0xff]
    %v1407 = vld [vmem:[%s1405 + $0x8] sm:$0xff]
    %v1408 = vld [vmem:[%s1405 + $0x10] sm:$0xff]
    %v1409 = vld [vmem:[%s1405 + $0x18] sm:$0xff]
    %v1410 = vrot.slane %v1233, 6
    %v1411 = vsel %vm636, %v1410, 0
    %1413 = vmatpush.msra.mxu0 0.0
    %1414 = vmatpush.msra.mxu0 0.0
    %1415 = vmatpush.msra.mxu0 0.0
    %1416 = vmatpush.msra.mxu0 0.0
    %1417 = vmatpush.msra.mxu0 0.0
    %1418 = vmatpush.msra.mxu0 0.0
    %1419 = vmatpush.msra.mxu0 0.0
    %1420 = vmatpush.msra.mxu0 0.0
    %1421 = vmatpush.msra.mxu0 0.0
    %1422 = vmatpush.msra.mxu0 0.0
    %1423 = vmatpush.msra.mxu0 0.0
    %1424 = vmatpush.msra.mxu0 0.0
    %1425 = vmatpush.msra.mxu0 %v1409
    %1426 = vmatpush.msra.mxu0 %v1408
    %1427 = vmatpush.msra.mxu0 %v1407
    %1428 = vmatpush.msra.mxu0 %v1406
    %1429 = vmatmul.f32.gmra.mxu0 %v1411
    %v1430 = vpop.f32.mrf.mxu0
    %v1431 = vadd.f32 0.0, %v1430
    %1432 = vdwg.mxu0
    %v1433 = vadd.f32 %v1404, %v1431
    %v1434 = vld [vmem:[#allocation23] sm:$0x1]
    %v1435 = vadd.f32 %v1433, %v1434
    %v1436 = vmax.f32 %v1435, 0.0
    %v1437 = vld [vmem:[#allocation25] sm:$0xff]
    %v1438 = vld [vmem:[#allocation25 + $0x8] sm:$0xff]
    %v1439 = vld [vmem:[#allocation25 + $0x10] sm:$0xff]
    %v1440 = vld [vmem:[#allocation25 + $0x18] sm:$0xff]
    %v1441 = vld [vmem:[#allocation26] sm:$0x1]
    %v1443 = vsel %vm636, %v1436, 0
    %1445 = vmatpush.msra.mxu0 0.0
    %1446 = vmatpush.msra.mxu0 0.0
    %1447 = vmatpush.msra.mxu0 0.0
    %1448 = vmatpush.msra.mxu0 0.0
    %1449 = vmatpush.msra.mxu0 0.0
    %1450 = vmatpush.msra.mxu0 0.0
    %1451 = vmatpush.msra.mxu0 0.0
    %1452 = vmatpush.msra.mxu0 0.0
    %1453 = vmatpush.msra.mxu0 0.0
    %1454 = vmatpush.msra.mxu0 0.0
    %1455 = vmatpush.msra.mxu0 0.0
    %1456 = vmatpush.msra.mxu0 0.0
    %1457 = vmatpush.msra.mxu0 %v1440
    %1458 = vmatpush.msra.mxu0 %v1439
    %1459 = vmatpush.msra.mxu0 %v1438
    %1460 = vmatpush.msra.mxu0 %v1437
    %1461 = vmatmul.f32.gmra.mxu0 %v1443
    %v1462 = vpop.f32.mrf.mxu0
    %v1463 = vadd.f32 %v1441, %v1462
    %1464 = vdwg.mxu0
    %v1465 = vmax.f32 %v1463, 0.0
    %v1466 = vadd.f32 %v892, %v1465
    %v1467 = vld [vmem:[#allocation28] sm:$0xff]
    %v1468 = vld [vmem:[#allocation28 + $0x8] sm:$0xff]
    %v1469 = vld [vmem:[#allocation28 + $0x10] sm:$0xff]
    %v1470 = vld [vmem:[#allocation28 + $0x18] sm:$0xff]
    %v1471 = vld [vmem:[#allocation29] sm:$0x1]
    %v1473 = vsel %vm636, %v1466, 0
    %1475 = vmatpush.msra.mxu0 0.0
    %1476 = vmatpush.msra.mxu0 0.0
    %1477 = vmatpush.msra.mxu0 0.0
    %1478 = vmatpush.msra.mxu0 0.0
    %1479 = vmatpush.msra.mxu0 0.0
    %1480 = vmatpush.msra.mxu0 0.0
    %1481 = vmatpush.msra.mxu0 0.0
    %1482 = vmatpush.msra.mxu0 0.0
    %1483 = vmatpush.msra.mxu0 0.0
    %1484 = vmatpush.msra.mxu0 0.0
    %1485 = vmatpush.msra.mxu0 0.0
    %1486 = vmatpush.msra.mxu0 0.0
    %1487 = vmatpush.msra.mxu0 %v1470
    %1488 = vmatpush.msra.mxu0 %v1469
    %1489 = vmatpush.msra.mxu0 %v1468
    %1490 = vmatpush.msra.mxu0 %v1467
    %1491 = vmatmul.f32.gmra.mxu0 %v1473
    %v1492 = vpop.f32.mrf.mxu0
    %v1493 = vadd.f32 %v1471, %v1492
    %1494 = vdwg.mxu0
    %v1495 = vmax.f32 %v1493, 0.0
    %v1496 = vld [vmem:[#allocation31] sm:$0xff]
    %v1497 = vld [vmem:[#allocation31 + $0x8] sm:$0xff]
    %v1498 = vld [vmem:[#allocation31 + $0x10] sm:$0xff]
    %v1499 = vld [vmem:[#allocation31 + $0x18] sm:$0xff]
    %v1500 = vld [vmem:[#allocation32] sm:$0x1]
    %v1502 = vsel %vm636, %v1495, 0
    %1504 = vmatpush.msra.mxu0 0.0
    %1505 = vmatpush.msra.mxu0 0.0
    %1506 = vmatpush.msra.mxu0 0.0
    %1507 = vmatpush.msra.mxu0 0.0
    %1508 = vmatpush.msra.mxu0 0.0
    %1509 = vmatpush.msra.mxu0 0.0
    %1510 = vmatpush.msra.mxu0 0.0
    %1511 = vmatpush.msra.mxu0 0.0
    %1512 = vmatpush.msra.mxu0 0.0
    %1513 = vmatpush.msra.mxu0 0.0
    %1514 = vmatpush.msra.mxu0 0.0
    %1515 = vmatpush.msra.mxu0 0.0
    %1516 = vmatpush.msra.mxu0 %v1499
    %1517 = vmatpush.msra.mxu0 %v1498
    %1518 = vmatpush.msra.mxu0 %v1497
    %1519 = vmatpush.msra.mxu0 %v1496
    %1520 = vmatmul.f32.gmra.mxu0 %v1502
    %v1521 = vpop.f32.mrf.mxu0
    %v1522 = vadd.f32 %v1500, %v1521
    %1523 = vdwg.mxu0
    %v1524 = vmax.f32 %v1522, 0.0
    %v1525 = vld [vmem:[%s57] sm:$0xff]
    %v1526 = vld [vmem:[%s57 + $0x8] sm:$0xff]
    %v1527 = vld [vmem:[%s57 + $0x10] sm:$0xff]
    %v1528 = vld [vmem:[%s57 + $0x18] sm:$0xff]
    %v1529 = vld [vmem:[#allocation2] sm:$0x1]
    %v1531 = vsel %vm636, %v1524, 0
    %1533 = vmatpush.msra.mxu0 0.0
    %1534 = vmatpush.msra.mxu0 0.0
    %1535 = vmatpush.msra.mxu0 0.0
    %1536 = vmatpush.msra.mxu0 0.0
    %1537 = vmatpush.msra.mxu0 0.0
    %1538 = vmatpush.msra.mxu0 0.0
    %1539 = vmatpush.msra.mxu0 0.0
    %1540 = vmatpush.msra.mxu0 0.0
    %1541 = vmatpush.msra.mxu0 0.0
    %1542 = vmatpush.msra.mxu0 0.0
    %1543 = vmatpush.msra.mxu0 0.0
    %1544 = vmatpush.msra.mxu0 0.0
    %1545 = vmatpush.msra.mxu0 %v1528
    %1546 = vmatpush.msra.mxu0 %v1527
    %1547 = vmatpush.msra.mxu0 %v1526
    %1548 = vmatpush.msra.mxu0 %v1525
    %1549 = vmatmul.f32.gmra.mxu0 %v1531
    %v1550 = vpop.f32.mrf.mxu0
    %v1551 = vadd.f32 %v1529, %v1550
    %1552 = vdwg.mxu0
    %v1553 = vmax.f32 %v1551, 0.0
    %v1554 = vmul.f32 %v1553, 0.1
    %vm1555 = vcmask 0
    %1556 = vst.msk [vmem:[%s61] sm:$0x1] %vm1555, %v1554
    %v1558 = vrot.slane %v952, 1
    %v1560 = vadd.f32 %v924, %v1558
    %v1562 = vrot.slane %v980, 2
    %v1564 = vadd.f32 %v1560, %v1562
    %v1565 = vld [vmem:[#allocation11] sm:$0x1]
    %v1567 = vperm.slane %v1565, 0
    %v1569 = vadd.f32 %v1564, %v1567
    %v1570 = vmax.f32 %v1569, 0.0
    %v1571 = vsel %vm1109, %v1570, -inf
    %v1572 = vrot.slane %v1571, 4
    %v1573 = vmax.f32 %v1571, %v1572
    %v1574 = vrot.slane %v1573, 2
    %v1575 = vmax.f32 %v1573, %v1574
    %v1576 = vrot.slane %v1575, 1
    %v1577 = vmax.f32 %v1575, %v1576
    %v1578 = vld [vmem:[#allocation13] sm:$0xff]
    %v1579 = vld [vmem:[#allocation13 + $0x8] sm:$0xff]
    %v1580 = vld [vmem:[#allocation13 + $0x10] sm:$0xff]
    %v1581 = vld [vmem:[#allocation13 + $0x18] sm:$0xff]
    %v1582 = vld [vmem:[#allocation14] sm:$0x1]
    %v1584 = vsel %vm636, %v1577, 0
    %1586 = vmatpush.msra.mxu0 0.0
    %1587 = vmatpush.msra.mxu0 0.0
    %1588 = vmatpush.msra.mxu0 0.0
    %1589 = vmatpush.msra.mxu0 0.0
    %1590 = vmatpush.msra.mxu0 0.0
    %1591 = vmatpush.msra.mxu0 0.0
    %1592 = vmatpush.msra.mxu0 0.0
    %1593 = vmatpush.msra.mxu0 0.0
    %1594 = vmatpush.msra.mxu0 0.0
    %1595 = vmatpush.msra.mxu0 0.0
    %1596 = vmatpush.msra.mxu0 0.0
    %1597 = vmatpush.msra.mxu0 0.0
    %1598 = vmatpush.msra.mxu0 %v1581
    %1599 = vmatpush.msra.mxu0 %v1580
    %1600 = vmatpush.msra.mxu0 %v1579
    %1601 = vmatpush.msra.mxu0 %v1578
    %1602 = vmatmul.f32.gmra.mxu0 %v1584
    %v1603 = vpop.f32.mrf.mxu0
    %v1604 = vadd.f32 %v1582, %v1603
    %1605 = vdwg.mxu0
    %v1606 = vmax.f32 %v1604, 0.0
    %v1609 = vrot.slane %v1056, 1
    %v1610 = vrot.slane %v1059, 1
    %v1611 = vsel %vm1148, %v1609, %v1610
    %v1614 = vadd.f32 %v1022, %v1611
    %v1615 = vadd.f32 %v1025, %v1610
    %v1618 = vrot.slane %v1090, 2
    %v1619 = vrot.slane %v1093, 2
    %v1620 = vsel %vm1158, %v1618, %v1619
    %v1623 = vadd.f32 %v1614, %v1620
    %v1624 = vadd.f32 %v1615, %v1619
    %v1625 = vld [vmem:[#allocation17] sm:$0x1]
    %v1627 = vperm.slane %v1625, 0
    %v1629 = vadd.f32 %v1623, %v1627
    %v1630 = vadd.f32 %v1624, %v1627
    %v1631 = vmax.f32 %v1629, 0.0
    %v1632 = vmax.f32 %v1630, 0.0
    %v1635 = vrot.slane %v1631, 1
    %v1636 = vrot.slane %v1632, 1
    %v1637 = vsel %vm1148, %v1635, %v1636
    %v1640 = vmax.f32 %v1631, %v1637
    %v1641 = vmax.f32 %v1632, %v1636
    %v1644 = vrot.slane %v1640, 2
    %v1645 = vrot.slane %v1641, 2
    %v1646 = vsel %vm1158, %v1644, %v1645
    %v1649 = vmax.f32 %v1640, %v1646
    %v1650 = vmax.f32 %v1641, %v1645
    %v1653 = vrot.slane %v1649, 4
    %v1654 = vrot.slane %v1650, 4
    %v1655 = vsel %vm1194, %v1653, %v1654
    %v1657 = vmax.f32 %v1649, %v1655
    %v1658 = vld [vmem:[#allocation19] sm:$0xff]
    %v1659 = vld [vmem:[#allocation19 + $0x8] sm:$0xff]
    %v1660 = vld [vmem:[#allocation19 + $0x10] sm:$0xff]
    %v1661 = vld [vmem:[#allocation19 + $0x18] sm:$0xff]
    %v1662 = vld [vmem:[#allocation20] sm:$0x1]
    %v1664 = vperm.slane %v1662, 0
    %v1667 = vsel %vm636, %v1657, 0
    %1669 = vmatpush.msra.mxu0 0.0
    %1670 = vmatpush.msra.mxu0 0.0
    %1671 = vmatpush.msra.mxu0 0.0
    %1672 = vmatpush.msra.mxu0 0.0
    %1673 = vmatpush.msra.mxu0 0.0
    %1674 = vmatpush.msra.mxu0 0.0
    %1675 = vmatpush.msra.mxu0 0.0
    %1676 = vmatpush.msra.mxu0 0.0
    %1677 = vmatpush.msra.mxu0 0.0
    %1678 = vmatpush.msra.mxu0 0.0
    %1679 = vmatpush.msra.mxu0 0.0
    %1680 = vmatpush.msra.mxu0 0.0
    %1681 = vmatpush.msra.mxu0 %v1661
    %1682 = vmatpush.msra.mxu0 %v1660
    %1683 = vmatpush.msra.mxu0 %v1659
    %1684 = vmatpush.msra.mxu0 %v1658
    %1685 = vmatmul.f32.gmra.mxu0 %v1667
    %v1686 = vpop.f32.mrf.mxu0
    %v1687 = vadd.f32 %v1664, %v1686
    %1688 = vdwg.mxu0
    %v1689 = vmax.f32 %v1687, 0.0
    %v1690 = vperm.slane %v1606, 0
    %v1691 = vmul.f32 %v1689, %v1690
    %v1692 = vld [vmem:[#allocation22] sm:$0xff]
    %v1693 = vld [vmem:[#allocation22 + $0x8] sm:$0xff]
    %v1694 = vld [vmem:[#allocation22 + $0x10] sm:$0xff]
    %v1695 = vld [vmem:[#allocation22 + $0x18] sm:$0xff]
    %v1696 = vld [vmem:[%s1238] sm:$0xff]
    %v1697 = vld [vmem:[%s1238 + $0x8] sm:$0xff]
    %v1698 = vld [vmem:[%s1238 + $0x10] sm:$0xff]
    %v1699 = vld [vmem:[%s1238 + $0x18] sm:$0xff]
    %v1701 = vrot.slane %v1691, 1
    %v1702 = vsel %vm636, %v1701, 0
    %1704 = vmatpush.msra.mxu0 0.0
    %1705 = vmatpush.msra.mxu0 0.0
    %1706 = vmatpush.msra.mxu0 0.0
    %1707 = vmatpush.msra.mxu0 0.0
    %1708 = vmatpush.msra.mxu0 0.0
    %1709 = vmatpush.msra.mxu0 0.0
    %1710 = vmatpush.msra.mxu0 0.0
    %1711 = vmatpush.msra.mxu0 0.0
    %1712 = vmatpush.msra.mxu0 0.0
    %1713 = vmatpush.msra.mxu0 0.0
    %1714 = vmatpush.msra.mxu0 0.0
    %1715 = vmatpush.msra.mxu0 0.0
    %1716 = vmatpush.msra.mxu0 %v1699
    %1717 = vmatpush.msra.mxu0 %v1698
    %1718 = vmatpush.msra.mxu0 %v1697
    %1719 = vmatpush.msra.mxu0 %v1696
    %1720 = vmatmul.f32.gmra.mxu0 %v1702
    %v1721 = vpop.f32.mrf.mxu0
    %v1722 = vadd.f32 0.0, %v1721
    %1723 = vdwg.mxu0
    %v1724 = vsel %vm636, %v1691, 0
    %1726 = vmatpush.msra.mxu0 0.0
    %1727 = vmatpush.msra.mxu0 0.0
    %1728 = vmatpush.msra.mxu0 0.0
    %1729 = vmatpush.msra.mxu0 0.0
    %1730 = vmatpush.msra.mxu0 0.0
    %1731 = vmatpush.msra.mxu0 0.0
    %1732 = vmatpush.msra.mxu0 0.0
    %1733 = vmatpush.msra.mxu0 0.0
    %1734 = vmatpush.msra.mxu0 0.0
    %1735 = vmatpush.msra.mxu0 0.0
    %1736 = vmatpush.msra.mxu0 0.0
    %1737 = vmatpush.msra.mxu0 0.0
    %1738 = vmatpush.msra.mxu0 %v1695
    %1739 = vmatpush.msra.mxu0 %v1694
    %1740 = vmatpush.msra.mxu0 %v1693
    %1741 = vmatpush.msra.mxu0 %v1692
    %1742 = vmatmul.f32.gmra.mxu0 %v1724
    %v1743 = vpop.f32.mrf.mxu0
    %v1744 = vadd.f32 %v1722, %v1743
    %1745 = vdwg.mxu0
    %v1746 = vld [vmem:[%s1289] sm:$0xff]
    %v1747 = vld [vmem:[%s1289 + $0x8] sm:$0xff]
    %v1748 = vld [vmem:[%s1289 + $0x10] sm:$0xff]
    %v1749 = vld [vmem:[%s1289 + $0x18] sm:$0xff]
    %v1750 = vrot.slane %v1691, 2
    %v1751 = vsel %vm636, %v1750, 0
    %1753 = vmatpush.msra.mxu0 0.0
    %1754 = vmatpush.msra.mxu0 0.0
    %1755 = vmatpush.msra.mxu0 0.0
    %1756 = vmatpush.msra.mxu0 0.0
    %1757 = vmatpush.msra.mxu0 0.0
    %1758 = vmatpush.msra.mxu0 0.0
    %1759 = vmatpush.msra.mxu0 0.0
    %1760 = vmatpush.msra.mxu0 0.0
    %1761 = vmatpush.msra.mxu0 0.0
    %1762 = vmatpush.msra.mxu0 0.0
    %1763 = vmatpush.msra.mxu0 0.0
    %1764 = vmatpush.msra.mxu0 0.0
    %1765 = vmatpush.msra.mxu0 %v1749
    %1766 = vmatpush.msra.mxu0 %v1748
    %1767 = vmatpush.msra.mxu0 %v1747
    %1768 = vmatpush.msra.mxu0 %v1746
    %1769 = vmatmul.f32.gmra.mxu0 %v1751
    %v1770 = vpop.f32.mrf.mxu0
    %v1771 = vadd.f32 0.0, %v1770
    %1772 = vdwg.mxu0
    %v1773 = vadd.f32 %v1744, %v1771
    %v1774 = vld [vmem:[%s1318] sm:$0xff]
    %v1775 = vld [vmem:[%s1318 + $0x8] sm:$0xff]
    %v1776 = vld [vmem:[%s1318 + $0x10] sm:$0xff]
    %v1777 = vld [vmem:[%s1318 + $0x18] sm:$0xff]
    %v1778 = vrot.slane %v1691, 3
    %v1779 = vsel %vm636, %v1778, 0
    %1781 = vmatpush.msra.mxu0 0.0
    %1782 = vmatpush.msra.mxu0 0.0
    %1783 = vmatpush.msra.mxu0 0.0
    %1784 = vmatpush.msra.mxu0 0.0
    %1785 = vmatpush.msra.mxu0 0.0
    %1786 = vmatpush.msra.mxu0 0.0
    %1787 = vmatpush.msra.mxu0 0.0
    %1788 = vmatpush.msra.mxu0 0.0
    %1789 = vmatpush.msra.mxu0 0.0
    %1790 = vmatpush.msra.mxu0 0.0
    %1791 = vmatpush.msra.mxu0 0.0
    %1792 = vmatpush.msra.mxu0 0.0
    %1793 = vmatpush.msra.mxu0 %v1777
    %1794 = vmatpush.msra.mxu0 %v1776
    %1795 = vmatpush.msra.mxu0 %v1775
    %1796 = vmatpush.msra.mxu0 %v1774
    %1797 = vmatmul.f32.gmra.mxu0 %v1779
    %v1798 = vpop.f32.mrf.mxu0
    %v1799 = vadd.f32 0.0, %v1798
    %1800 = vdwg.mxu0
    %v1801 = vadd.f32 %v1773, %v1799
    %v1802 = vld [vmem:[%s1347] sm:$0xff]
    %v1803 = vld [vmem:[%s1347 + $0x8] sm:$0xff]
    %v1804 = vld [vmem:[%s1347 + $0x10] sm:$0xff]
    %v1805 = vld [vmem:[%s1347 + $0x18] sm:$0xff]
    %v1806 = vrot.slane %v1691, 4
    %v1807 = vsel %vm636, %v1806, 0
    %1809 = vmatpush.msra.mxu0 0.0
    %1810 = vmatpush.msra.mxu0 0.0
    %1811 = vmatpush.msra.mxu0 0.0
    %1812 = vmatpush.msra.mxu0 0.0
    %1813 = vmatpush.msra.mxu0 0.0
    %1814 = vmatpush.msra.mxu0 0.0
    %1815 = vmatpush.msra.mxu0 0.0
    %1816 = vmatpush.msra.mxu0 0.0
    %1817 = vmatpush.msra.mxu0 0.0
    %1818 = vmatpush.msra.mxu0 0.0
    %1819 = vmatpush.msra.mxu0 0.0
    %1820 = vmatpush.msra.mxu0 0.0
    %1821 = vmatpush.msra.mxu0 %v1805
    %1822 = vmatpush.msra.mxu0 %v1804
    %1823 = vmatpush.msra.mxu0 %v1803
    %1824 = vmatpush.msra.mxu0 %v1802
    %1825 = vmatmul.f32.gmra.mxu0 %v1807
    %v1826 = vpop.f32.mrf.mxu0
    %v1827 = vadd.f32 0.0, %v1826
    %1828 = vdwg.mxu0
    %v1829 = vadd.f32 %v1801, %v1827
    %v1830 = vld [vmem:[%s1376] sm:$0xff]
    %v1831 = vld [vmem:[%s1376 + $0x8] sm:$0xff]
    %v1832 = vld [vmem:[%s1376 + $0x10] sm:$0xff]
    %v1833 = vld [vmem:[%s1376 + $0x18] sm:$0xff]
    %v1834 = vrot.slane %v1691, 5
    %v1835 = vsel %vm636, %v1834, 0
    %1837 = vmatpush.msra.mxu0 0.0
    %1838 = vmatpush.msra.mxu0 0.0
    %1839 = vmatpush.msra.mxu0 0.0
    %1840 = vmatpush.msra.mxu0 0.0
    %1841 = vmatpush.msra.mxu0 0.0
    %1842 = vmatpush.msra.mxu0 0.0
    %1843 = vmatpush.msra.mxu0 0.0
    %1844 = vmatpush.msra.mxu0 0.0
    %1845 = vmatpush.msra.mxu0 0.0
    %1846 = vmatpush.msra.mxu0 0.0
    %1847 = vmatpush.msra.mxu0 0.0
    %1848 = vmatpush.msra.mxu0 0.0
    %1849 = vmatpush.msra.mxu0 %v1833
    %1850 = vmatpush.msra.mxu0 %v1832
    %1851 = vmatpush.msra.mxu0 %v1831
    %1852 = vmatpush.msra.mxu0 %v1830
    %1853 = vmatmul.f32.gmra.mxu0 %v1835
    %v1854 = vpop.f32.mrf.mxu0
    %v1855 = vadd.f32 0.0, %v1854
    %1856 = vdwg.mxu0
    %v1857 = vadd.f32 %v1829, %v1855
    %v1858 = vld [vmem:[%s1405] sm:$0xff]
    %v1859 = vld [vmem:[%s1405 + $0x8] sm:$0xff]
    %v1860 = vld [vmem:[%s1405 + $0x10] sm:$0xff]
    %v1861 = vld [vmem:[%s1405 + $0x18] sm:$0xff]
    %v1862 = vrot.slane %v1691, 6
    %v1863 = vsel %vm636, %v1862, 0
    %1865 = vmatpush.msra.mxu0 0.0
    %1866 = vmatpush.msra.mxu0 0.0
    %1867 = vmatpush.msra.mxu0 0.0
    %1868 = vmatpush.msra.mxu0 0.0
    %1869 = vmatpush.msra.mxu0 0.0
    %1870 = vmatpush.msra.mxu0 0.0
    %1871 = vmatpush.msra.mxu0 0.0
    %1872 = vmatpush.msra.mxu0 0.0
    %1873 = vmatpush.msra.mxu0 0.0
    %1874 = vmatpush.msra.mxu0 0.0
    %1875 = vmatpush.msra.mxu0 0.0
    %1876 = vmatpush.msra.mxu0 0.0
    %1877 = vmatpush.msra.mxu0 %v1861
    %1878 = vmatpush.msra.mxu0 %v1860
    %1879 = vmatpush.msra.mxu0 %v1859
    %1880 = vmatpush.msra.mxu0 %v1858
    %1881 = vmatmul.f32.gmra.mxu0 %v1863
    %v1882 = vpop.f32.mrf.mxu0
    %v1883 = vadd.f32 0.0, %v1882
    %1884 = vdwg.mxu0
    %v1885 = vadd.f32 %v1857, %v1883
    %v1886 = vld [vmem:[#allocation23] sm:$0x1]
    %v1887 = vadd.f32 %v1885, %v1886
    %v1888 = vmax.f32 %v1887, 0.0
    %v1889 = vld [vmem:[#allocation25] sm:$0xff]
    %v1890 = vld [vmem:[#allocation25 + $0x8] sm:$0xff]
    %v1891 = vld [vmem:[#allocation25 + $0x10] sm:$0xff]
    %v1892 = vld [vmem:[#allocation25 + $0x18] sm:$0xff]
    %v1893 = vld [vmem:[#allocation26] sm:$0x1]
    %v1895 = vsel %vm636, %v1888, 0
    %1897 = vmatpush.msra.mxu0 0.0
    %1898 = vmatpush.msra.mxu0 0.0
    %1899 = vmatpush.msra.mxu0 0.0
    %1900 = vmatpush.msra.mxu0 0.0
    %1901 = vmatpush.msra.mxu0 0.0
    %1902 = vmatpush.msra.mxu0 0.0
    %1903 = vmatpush.msra.mxu0 0.0
    %1904 = vmatpush.msra.mxu0 0.0
    %1905 = vmatpush.msra.mxu0 0.0
    %1906 = vmatpush.msra.mxu0 0.0
    %1907 = vmatpush.msra.mxu0 0.0
    %1908 = vmatpush.msra.mxu0 0.0
    %1909 = vmatpush.msra.mxu0 %v1892
    %1910 = vmatpush.msra.mxu0 %v1891
    %1911 = vmatpush.msra.mxu0 %v1890
    %1912 = vmatpush.msra.mxu0 %v1889
    %1913 = vmatmul.f32.gmra.mxu0 %v1895
    %v1914 = vpop.f32.mrf.mxu0
    %v1915 = vadd.f32 %v1893, %v1914
    %1916 = vdwg.mxu0
    %v1917 = vmax.f32 %v1915, 0.0
    %v1919 = vrot.slane %v1917, 7
    %v1921 = vadd.f32 %v892, %v1919
    %v1922 = vld [vmem:[#allocation28] sm:$0xff]
    %v1923 = vld [vmem:[#allocation28 + $0x8] sm:$0xff]
    %v1924 = vld [vmem:[#allocation28 + $0x10] sm:$0xff]
    %v1925 = vld [vmem:[#allocation28 + $0x18] sm:$0xff]
    %v1926 = vld [vmem:[#allocation29] sm:$0x1]
    %v1928 = vrot.slane %v1921, 1
    %v1929 = vsel %vm636, %v1928, 0
    %1931 = vmatpush.msra.mxu0 0.0
    %1932 = vmatpush.msra.mxu0 0.0
    %1933 = vmatpush.msra.mxu0 0.0
    %1934 = vmatpush.msra.mxu0 0.0
    %1935 = vmatpush.msra.mxu0 0.0
    %1936 = vmatpush.msra.mxu0 0.0
    %1937 = vmatpush.msra.mxu0 0.0
    %1938 = vmatpush.msra.mxu0 0.0
    %1939 = vmatpush.msra.mxu0 0.0
    %1940 = vmatpush.msra.mxu0 0.0
    %1941 = vmatpush.msra.mxu0 0.0
    %1942 = vmatpush.msra.mxu0 0.0
    %1943 = vmatpush.msra.mxu0 %v1925
    %1944 = vmatpush.msra.mxu0 %v1924
    %1945 = vmatpush.msra.mxu0 %v1923
    %1946 = vmatpush.msra.mxu0 %v1922
    %1947 = vmatmul.f32.gmra.mxu0 %v1929
    %v1948 = vpop.f32.mrf.mxu0
    %v1949 = vadd.f32 %v1926, %v1948
    %1950 = vdwg.mxu0
    %v1951 = vmax.f32 %v1949, 0.0
    %v1952 = vld [vmem:[#allocation31] sm:$0xff]
    %v1953 = vld [vmem:[#allocation31 + $0x8] sm:$0xff]
    %v1954 = vld [vmem:[#allocation31 + $0x10] sm:$0xff]
    %v1955 = vld [vmem:[#allocation31 + $0x18] sm:$0xff]
    %v1956 = vld [vmem:[#allocation32] sm:$0x1]
    %v1958 = vsel %vm636, %v1951, 0
    %1960 = vmatpush.msra.mxu0 0.0
    %1961 = vmatpush.msra.mxu0 0.0
    %1962 = vmatpush.msra.mxu0 0.0
    %1963 = vmatpush.msra.mxu0 0.0
    %1964 = vmatpush.msra.mxu0 0.0
    %1965 = vmatpush.msra.mxu0 0.0
    %1966 = vmatpush.msra.mxu0 0.0
    %1967 = vmatpush.msra.mxu0 0.0
    %1968 = vmatpush.msra.mxu0 0.0
    %1969 = vmatpush.msra.mxu0 0.0
    %1970 = vmatpush.msra.mxu0 0.0
    %1971 = vmatpush.msra.mxu0 0.0
    %1972 = vmatpush.msra.mxu0 %v1955
    %1973 = vmatpush.msra.mxu0 %v1954
    %1974 = vmatpush.msra.mxu0 %v1953
    %1975 = vmatpush.msra.mxu0 %v1952
    %1976 = vmatmul.f32.gmra.mxu0 %v1958
    %v1977 = vpop.f32.mrf.mxu0
    %v1978 = vadd.f32 %v1956, %v1977
    %1979 = vdwg.mxu0
    %v1980 = vmax.f32 %v1978, 0.0
    %v1981 = vld [vmem:[%s57] sm:$0xff]
    %v1982 = vld [vmem:[%s57 + $0x8] sm:$0xff]
    %v1983 = vld [vmem:[%s57 + $0x10] sm:$0xff]
    %v1984 = vld [vmem:[%s57 + $0x18] sm:$0xff]
    %v1985 = vld [vmem:[#allocation2] sm:$0x1]
    %v1987 = vsel %vm636, %v1980, 0
    %1989 = vmatpush.msra.mxu0 0.0
    %1990 = vmatpush.msra.mxu0 0.0
    %1991 = vmatpush.msra.mxu0 0.0
    %1992 = vmatpush.msra.mxu0 0.0
    %1993 = vmatpush.msra.mxu0 0.0
    %1994 = vmatpush.msra.mxu0 0.0
    %1995 = vmatpush.msra.mxu0 0.0
    %1996 = vmatpush.msra.mxu0 0.0
    %1997 = vmatpush.msra.mxu0 0.0
    %1998 = vmatpush.msra.mxu0 0.0
    %1999 = vmatpush.msra.mxu0 0.0
    %2000 = vmatpush.msra.mxu0 0.0
    %2001 = vmatpush.msra.mxu0 %v1984
    %2002 = vmatpush.msra.mxu0 %v1983
    %2003 = vmatpush.msra.mxu0 %v1982
    %2004 = vmatpush.msra.mxu0 %v1981
    %2005 = vmatmul.f32.gmra.mxu0 %v1987
    %v2006 = vpop.f32.mrf.mxu0
    %v2007 = vadd.f32 %v1985, %v2006
    %2008 = vdwg.mxu0
    %v2009 = vmax.f32 %v2007, 0.0
    %v2010 = vmul.f32 %v2009, 0.1
    %2011 = vst.msk [vmem:[%s61 + $0x1] sm:$0x1] %vm1555, %v2010
    // Predicated region
    $region202: #{duet_forward.1} parent=1 // pred_check
      _
    $region203: #{duet_forward.1} parent=1 // pred_check_branch
      %2013 = sbr.rel (0) target = $region205
    $region204: #{duet_forward.1} parent=1 // pred_region
      _
    $region205: #{duet_forward.1} parent=1 // pred_fallthru
      _
    // Predicated region
    $region206: #{duet_forward.1} parent=1 // pred_check
      _
    $region207: #{duet_forward.1} parent=1 // pred_check_branch
      %2015 = sbr.rel (0) target = $region209
    $region208: #{duet_forward.1} parent=1 // pred_region
      _
    $region209: #{duet_forward.1} parent=1 // pred_fallthru
      _
    %2016 = vsyncpa [#allocation4], 1
    %2017 = vsyncpa [#allocation6], 1
    %2018 = vsyncpa [#allocation9], 1
    %2019 = vsyncpa [#allocation12], 1
    %2020 = vsyncpa [#allocation15], 1
    %2021 = vsyncpa [#allocation18], 1
    %2022 = vsyncpa [#allocation21], 1
    %2023 = vsyncpa [#allocation24], 1
    %2024 = vsyncpa [#allocation27], 1
    %2025 = vsyncpa [#allocation30], 1
    %2026 = vsyncpa [#allocation33], 1

</llo_original>
